<compile_context>
chip_gen: v7x
topology: tpu7x:2x2x1
jax: 0.10.0
libtpu: 0.0.40
codegen_flags: <defaults>
</compile_context>

<pallas_src>
import jax
import jax.numpy as jnp
from jax.experimental import pallas as pl
from jax.experimental.pallas import tpu as pltpu


# ----------------------------------------------------------------------------
# Fused kernel body: hoisted time-major input projection -> unrolled LSTM
# recurrence -> MLP head.  All shape parameters are derived statically from
# the ref shapes.
# ----------------------------------------------------------------------------
def _fused_kernel(x_ref, u_ref, lstm_ref, *refs):
    out_ref = refs[-1]
    mlp_refs = refs[:-1]

    TB, x_dim = x_ref.shape
    u_dim = u_ref.shape[1]
    B = out_ref.shape[0]
    T = TB // B
    H = lstm_ref.shape[1] // 4

    # ---- Unpack the packed LSTM slab (static sublane slices, no DMA cost).
    lstm = lstm_ref[...]                       # (x_dim + u_dim + H + 1, 4H)
    wihx = lstm[0:x_dim]                       # (x_dim, 4H)
    wihu = lstm[x_dim:x_dim + u_dim]           # (u_dim, 4H)
    whh = lstm[x_dim + u_dim:x_dim + u_dim + H]          # (H, 4H)
    bias = lstm[x_dim + u_dim + H:x_dim + u_dim + H + 1]  # (1, 4H)

    # ---- Hoisted input projection: no time dependency, one matmul per
    # weight over the whole time-major (T*B, *) input.
    gx = (jnp.dot(x_ref[...], wihx, preferred_element_type=jnp.float32)
          + jnp.dot(u_ref[...], wihu, preferred_element_type=jnp.float32)
          + bias)                              # (T*B, 4H)

    h = jnp.zeros((B, H), jnp.float32)
    c = jnp.zeros((B, H), jnp.float32)

    # ---- Serial recurrence, fully unrolled (T small & static).  Only
    # h @ W_hh + elementwise sits on the dependent per-step chain; the gx
    # slice is a static sublane slice of an already-computed value.
    for t in range(T):
        gates = gx[t * B:(t + 1) * B, :] + jnp.dot(
            h, whh, preferred_element_type=jnp.float32)   # (B, 4H)
        # Full-vreg transcendentals (EUP slot), then lane slices (XLU).
        sg = jax.nn.sigmoid(gates)
        tg = jnp.tanh(gates)
        i = sg[:, 0:H]                 # PyTorch gate order: i, f, g, o
        f = sg[:, H:2 * H]
        g = tg[:, 2 * H:3 * H]
        o = sg[:, 3 * H:4 * H]
        c = f * c + i * g
        h = o * jnp.tanh(c)

    # ---- MLP head on the final hidden state (== out[:, -1, :]).
    n_hidden = len(mlp_refs) - 1
    z = h
    for li in range(n_hidden):
        slab = mlp_refs[li][...]               # (fan_in + 2, fan_out)
        fan_in = slab.shape[0] - 2
        w = slab[0:fan_in]
        gamma = slab[fan_in:fan_in + 1]
        beta = slab[fan_in + 1:fan_in + 2]
        # Linear bias omitted: exactly cancelled by the BN mean subtraction.
        z = jnp.dot(z, w, preferred_element_type=jnp.float32)
        # BatchNorm1d in training mode: batch mean, biased variance.
        mean = jnp.mean(z, axis=0, keepdims=True)
        var = jnp.mean((z - mean) ** 2, axis=0, keepdims=True)
        z = (z - mean) * jax.lax.rsqrt(var + 1e-5) * gamma + beta
        z = jnp.maximum(z, 0.0)                # ReLU
    final = mlp_refs[n_hidden][...]            # (fan_in + 1, output_size)
    fan_in = final.shape[0] - 1
    w = final[0:fan_in]
    bb = final[fan_in:fan_in + 1]
    out_ref[...] = jnp.dot(z, w, preferred_element_type=jnp.float32) + bb


# ----------------------------------------------------------------------------
# Wrapper: one pallas_call, whole arrays as single VMEM blocks (everything is
# tiny, well under any VMEM limit).  X/U are made time-major in the wrapper.
# ----------------------------------------------------------------------------
@jax.jit
def mlp_rnn_forward(X, U, lstm_slab, mlp_slabs):
    B, T, x_dim = X.shape
    u_dim = U.shape[2]
    output_size = mlp_slabs[-1].shape[1]

    # Time-major flat layout: row (t*B + b) holds sample b at step t, so the
    # kernel's per-step gate input is a contiguous sublane slice.
    X2 = jnp.transpose(X, (1, 0, 2)).reshape(T * B, x_dim)
    U2 = jnp.transpose(U, (1, 0, 2)).reshape(T * B, u_dim)

    inputs = (X2, U2, lstm_slab) + tuple(mlp_slabs)
    in_specs = [pl.BlockSpec(a.shape, lambda i: (0, 0)) for a in inputs]

    return pl.pallas_call(
        _fused_kernel,
        out_shape=jax.ShapeDtypeStruct((B, output_size), jnp.float32),
        grid_spec=pltpu.PrefetchScalarGridSpec(
            num_scalar_prefetch=0,
            grid=(1,),
            in_specs=in_specs,
            out_specs=pl.BlockSpec((B, output_size), lambda i: (0, 0)),
        ),
        compiler_params=pltpu.CompilerParams(
            dimension_semantics=("arbitrary",)),
    )(*inputs)


# ----------------------------------------------------------------------------
# Deterministic parameter init (PyTorch-style uniform(-1/sqrt(fan), 1/sqrt(fan))).
# Returns packed kernel slabs AND the un-packed reference parameters (the
# reference keeps the hidden-layer Linear biases that the kernel drops).
# ----------------------------------------------------------------------------
def init_params(key, x_dim, u_dim, H, n_hidden, n_neurons, output_size):
    def uniform(k, shape, fan):
        bound = 1.0 / jnp.sqrt(jnp.asarray(fan, jnp.float32))
        return jax.random.uniform(k, shape, jnp.float32, -bound, bound)

    input_size = x_dim + u_dim
    keys = jax.random.split(key, 4 + 2 * n_hidden + 2)
    kidx = 0

    # LSTM weights in PyTorch layout (4H, in), stored pre-transposed for x @ W.
    w_ih = uniform(keys[kidx], (4 * H, input_size), H); kidx += 1
    w_hh = uniform(keys[kidx], (4 * H, H), H); kidx += 1
    b_ih = uniform(keys[kidx], (4 * H,), H); kidx += 1
    b_hh = uniform(keys[kidx], (4 * H,), H); kidx += 1
    wih_t = w_ih.T                                   # (input_size, 4H)
    whh_t = w_hh.T                                   # (H, 4H)
    bias = (b_ih + b_hh).reshape(1, 4 * H)
    # Packed LSTM slab: [W_ih X-rows; W_ih U-rows; W_hh; fused bias].
    lstm_slab = jnp.concatenate(
        [wih_t[:x_dim], wih_t[x_dim:], whh_t, bias], axis=0)

    # MLP: n_hidden x [Linear, BN(gamma=1, beta=0), ReLU], then final Linear.
    dims = [H] + [n_neurons] * n_hidden + [output_size]
    mlp_slabs = []
    ref_mlp = []
    for li in range(n_hidden):
        fin, fout = dims[li], dims[li + 1]
        w = uniform(keys[kidx], (fout, fin), fin); kidx += 1
        b = uniform(keys[kidx], (fout,), fin); kidx += 1
        gamma = jnp.ones((1, fout), jnp.float32)
        beta = jnp.zeros((1, fout), jnp.float32)
        # Kernel slab omits the Linear bias (cancelled by BN mean subtraction).
        mlp_slabs.append(jnp.concatenate([w.T, gamma, beta], axis=0))
        ref_mlp += [w.T, b.reshape(1, fout), gamma, beta]
    fin, fout = dims[-2], dims[-1]
    w = uniform(keys[kidx], (fout, fin), fin); kidx += 1
    b = uniform(keys[kidx], (fout,), fin); kidx += 1
    mlp_slabs.append(jnp.concatenate([w.T, b.reshape(1, fout)], axis=0))
    ref_mlp += [w.T, b.reshape(1, fout)]

    return (lstm_slab, tuple(mlp_slabs)), ((wih_t, whh_t, bias), tuple(ref_mlp))


# ----------------------------------------------------------------------------
# Pure-JAX reference (validation only).  Uses the full PyTorch parameterization
# including the hidden-layer Linear biases.
# ----------------------------------------------------------------------------
def reference_forward(X, U, ref_lstm, ref_mlp):
    hp = jax.lax.Precision.HIGHEST
    wih_t, whh_t, b = ref_lstm
    x = jnp.concatenate([X, U], axis=2)
    B, T, _ = x.shape
    H = whh_t.shape[0]
    h = jnp.zeros((B, H), jnp.float32)
    c = jnp.zeros((B, H), jnp.float32)
    for t in range(T):
        gates = (jnp.dot(x[:, t], wih_t, precision=hp)
                 + jnp.dot(h, whh_t, precision=hp) + b)
        i = jax.nn.sigmoid(gates[:, 0:H])
        f = jax.nn.sigmoid(gates[:, H:2 * H])
        g = jnp.tanh(gates[:, 2 * H:3 * H])
        o = jax.nn.sigmoid(gates[:, 3 * H:4 * H])
        c = f * c + i * g
        h = o * jnp.tanh(c)
    n_hidden = (len(ref_mlp) - 2) // 4
    z = h
    idx = 0
    for _ in range(n_hidden):
        w, bb, gamma, beta = ref_mlp[idx:idx + 4]
        idx += 4
        z = jnp.dot(z, w, precision=hp) + bb
        mean = jnp.mean(z, axis=0, keepdims=True)
        var = jnp.mean((z - mean) ** 2, axis=0, keepdims=True)
        z = (z - mean) * jax.lax.rsqrt(var + 1e-5) * gamma + beta
        z = jnp.maximum(z, 0.0)
    w, bb = ref_mlp[idx], ref_mlp[idx + 1]
    return jnp.dot(z, w, precision=hp) + bb


if __name__ == "__main__":
    # Small shapes consistent with the module's forward.
    B, T = 2, 8
    x_dim, u_dim = 4, 2
    recurrent_hidden_dim = 32       # 4H = 128 -> exact vreg/MXU lane width
    nb_hidden_layer = 2
    nb_neurons = 32
    output_size = 8

    key = jax.random.PRNGKey(0)
    kx, ku, kp = jax.random.split(key, 3)
    X = jax.random.normal(kx, (B, T, x_dim), jnp.float32)
    U = jax.random.normal(ku, (B, T, u_dim), jnp.float32)

    (lstm_slab, mlp_slabs), (ref_lstm, ref_mlp) = init_params(
        kp, x_dim, u_dim, recurrent_hidden_dim, nb_hidden_layer,
        nb_neurons, output_size)

    out = mlp_rnn_forward(X, U, lstm_slab, mlp_slabs)
    out = jax.block_until_ready(out)
    assert out.shape == (B, output_size)

    ref = reference_forward(X, U, ref_lstm, ref_mlp)
    assert jnp.allclose(out, ref, atol=2e-3, rtol=2e-3), (out, ref)

    print("KERNEL_OK")
</pallas_src>

<mosaic_0001>
module attributes {stable_mosaic.version = 11 : i64} {
  func.func @_fused_kernel(%arg0: i32, %arg1: memref<16x4xf32, #tpu.memory_space<vmem>>, %arg2: memref<16x2xf32, #tpu.memory_space<vmem>>, %arg3: memref<39x128xf32, #tpu.memory_space<vmem>>, %arg4: memref<34x32xf32, #tpu.memory_space<vmem>>, %arg5: memref<34x32xf32, #tpu.memory_space<vmem>>, %arg6: memref<33x8xf32, #tpu.memory_space<vmem>>, %arg7: memref<2x8xf32, #tpu.memory_space<vmem>>) attributes {dimension_semantics = [#tpu.dimension_semantics<arbitrary>], iteration_bounds = array<i64: 1>, scalar_prefetch = 0 : i64, scratch_operands = 0 : i64, tpu.core_type = #tpu.core_type<tc>, window_params = [{pipeline_mode = #tpu.pipeline_mode<synchronous>, transform_indices = @transform_0, window_bounds = array<i64: 16, 4>}, {pipeline_mode = #tpu.pipeline_mode<synchronous>, transform_indices = @transform_1, window_bounds = array<i64: 16, 2>}, {pipeline_mode = #tpu.pipeline_mode<synchronous>, transform_indices = @transform_2, window_bounds = array<i64: 39, 128>}, {pipeline_mode = #tpu.pipeline_mode<synchronous>, transform_indices = @transform_3, window_bounds = array<i64: 34, 32>}, {pipeline_mode = #tpu.pipeline_mode<synchronous>, transform_indices = @transform_4, window_bounds = array<i64: 34, 32>}, {pipeline_mode = #tpu.pipeline_mode<synchronous>, transform_indices = @transform_5, window_bounds = array<i64: 33, 8>}, {pipeline_mode = #tpu.pipeline_mode<synchronous>, transform_indices = @transform_6, window_bounds = array<i64: 2, 8>}]} {
    %c0 = arith.constant 0 : index
    %c0_0 = arith.constant 0 : index
    %0 = vector.load %arg3[%c0, %c0_0] : memref<39x128xf32, #tpu.memory_space<vmem>>, vector<39x128xf32>
    %1 = vector.extract_strided_slice %0 {offsets = [0, 0], sizes = [4, 128], strides = [1, 1]} : vector<39x128xf32> to vector<4x128xf32>
    %2 = vector.extract_strided_slice %0 {offsets = [4, 0], sizes = [2, 128], strides = [1, 1]} : vector<39x128xf32> to vector<2x128xf32>
    %3 = vector.extract_strided_slice %0 {offsets = [6, 0], sizes = [32, 128], strides = [1, 1]} : vector<39x128xf32> to vector<32x128xf32>
    %4 = vector.extract_strided_slice %0 {offsets = [38, 0], sizes = [1, 128], strides = [1, 1]} : vector<39x128xf32> to vector<1x128xf32>
    %c0_1 = arith.constant 0 : index
    %c0_2 = arith.constant 0 : index
    %5 = vector.load %arg1[%c0_1, %c0_2] : memref<16x4xf32, #tpu.memory_space<vmem>>, vector<16x4xf32>
    %cst = arith.constant dense<0.000000e+00> : vector<16x128xf32>
    %6 = tpu.matmul %5, %1, %cst {dimension_numbers = #tpu.dot_dimension_numbers<[1], [0], [0], [1], [0, 0, 1, 1], [], []>} : vector<16x4xf32>, vector<4x128xf32>, vector<16x128xf32> -> vector<16x128xf32>
    %c0_3 = arith.constant 0 : index
    %c0_4 = arith.constant 0 : index
    %7 = vector.load %arg2[%c0_3, %c0_4] : memref<16x2xf32, #tpu.memory_space<vmem>>, vector<16x2xf32>
    %cst_5 = arith.constant dense<0.000000e+00> : vector<16x128xf32>
    %8 = tpu.matmul %7, %2, %cst_5 {dimension_numbers = #tpu.dot_dimension_numbers<[1], [0], [0], [1], [0, 0, 1, 1], [], []>} : vector<16x2xf32>, vector<2x128xf32>, vector<16x128xf32> -> vector<16x128xf32>
    %9 = arith.addf %6, %8 : vector<16x128xf32>
    %10 = vector.broadcast %4 : vector<1x128xf32> to vector<16x128xf32>
    %11 = arith.addf %9, %10 : vector<16x128xf32>
    %cst_6 = arith.constant 0.000000e+00 : f32
    %12 = vector.broadcast %cst_6 : f32 to vector<2x32xf32>
    %cst_7 = arith.constant 0.000000e+00 : f32
    %13 = vector.broadcast %cst_7 : f32 to vector<2x32xf32>
    %14 = vector.extract_strided_slice %11 {offsets = [0, 0], sizes = [2, 128], strides = [1, 1]} : vector<16x128xf32> to vector<2x128xf32>
    %cst_8 = arith.constant dense<0.000000e+00> : vector<2x128xf32>
    %15 = tpu.matmul %12, %3, %cst_8 {dimension_numbers = #tpu.dot_dimension_numbers<[1], [0], [0], [1], [0, 0, 1, 1], [], []>} : vector<2x32xf32>, vector<32x128xf32>, vector<2x128xf32> -> vector<2x128xf32>
    %16 = arith.addf %14, %15 : vector<2x128xf32>
    %17 = arith.negf %16 : vector<2x128xf32>
    %18 = math.exp %17 : vector<2x128xf32>
    %cst_9 = arith.constant 1.000000e+00 : f32
    %19 = vector.broadcast %cst_9 : f32 to vector<2x128xf32>
    %20 = arith.addf %19, %18 : vector<2x128xf32>
    %21 = arith.divf %19, %20 : vector<2x128xf32>
    %22 = math.tanh %16 : vector<2x128xf32>
    %23 = vector.extract_strided_slice %21 {offsets = [0, 0], sizes = [2, 32], strides = [1, 1]} : vector<2x128xf32> to vector<2x32xf32>
    %24 = vector.extract_strided_slice %21 {offsets = [0, 32], sizes = [2, 32], strides = [1, 1]} : vector<2x128xf32> to vector<2x32xf32>
    %25 = vector.extract_strided_slice %22 {offsets = [0, 64], sizes = [2, 32], strides = [1, 1]} : vector<2x128xf32> to vector<2x32xf32>
    %26 = vector.extract_strided_slice %21 {offsets = [0, 96], sizes = [2, 32], strides = [1, 1]} : vector<2x128xf32> to vector<2x32xf32>
    %27 = arith.mulf %24, %13 : vector<2x32xf32>
    %28 = arith.mulf %23, %25 : vector<2x32xf32>
    %29 = arith.addf %27, %28 : vector<2x32xf32>
    %30 = math.tanh %29 : vector<2x32xf32>
    %31 = arith.mulf %26, %30 : vector<2x32xf32>
    %32 = vector.extract_strided_slice %11 {offsets = [2, 0], sizes = [2, 128], strides = [1, 1]} : vector<16x128xf32> to vector<2x128xf32>
    %cst_10 = arith.constant dense<0.000000e+00> : vector<2x128xf32>
    %33 = tpu.matmul %31, %3, %cst_10 {dimension_numbers = #tpu.dot_dimension_numbers<[1], [0], [0], [1], [0, 0, 1, 1], [], []>} : vector<2x32xf32>, vector<32x128xf32>, vector<2x128xf32> -> vector<2x128xf32>
    %34 = arith.addf %32, %33 : vector<2x128xf32>
    %35 = arith.negf %34 : vector<2x128xf32>
    %36 = math.exp %35 : vector<2x128xf32>
    %cst_11 = arith.constant 1.000000e+00 : f32
    %37 = vector.broadcast %cst_11 : f32 to vector<2x128xf32>
    %38 = arith.addf %37, %36 : vector<2x128xf32>
    %39 = arith.divf %37, %38 : vector<2x128xf32>
    %40 = math.tanh %34 : vector<2x128xf32>
    %41 = vector.extract_strided_slice %39 {offsets = [0, 0], sizes = [2, 32], strides = [1, 1]} : vector<2x128xf32> to vector<2x32xf32>
    %42 = vector.extract_strided_slice %39 {offsets = [0, 32], sizes = [2, 32], strides = [1, 1]} : vector<2x128xf32> to vector<2x32xf32>
    %43 = vector.extract_strided_slice %40 {offsets = [0, 64], sizes = [2, 32], strides = [1, 1]} : vector<2x128xf32> to vector<2x32xf32>
    %44 = vector.extract_strided_slice %39 {offsets = [0, 96], sizes = [2, 32], strides = [1, 1]} : vector<2x128xf32> to vector<2x32xf32>
    %45 = arith.mulf %42, %29 : vector<2x32xf32>
    %46 = arith.mulf %41, %43 : vector<2x32xf32>
    %47 = arith.addf %45, %46 : vector<2x32xf32>
    %48 = math.tanh %47 : vector<2x32xf32>
    %49 = arith.mulf %44, %48 : vector<2x32xf32>
    %50 = vector.extract_strided_slice %11 {offsets = [4, 0], sizes = [2, 128], strides = [1, 1]} : vector<16x128xf32> to vector<2x128xf32>
    %cst_12 = arith.constant dense<0.000000e+00> : vector<2x128xf32>
    %51 = tpu.matmul %49, %3, %cst_12 {dimension_numbers = #tpu.dot_dimension_numbers<[1], [0], [0], [1], [0, 0, 1, 1], [], []>} : vector<2x32xf32>, vector<32x128xf32>, vector<2x128xf32> -> vector<2x128xf32>
    %52 = arith.addf %50, %51 : vector<2x128xf32>
    %53 = arith.negf %52 : vector<2x128xf32>
    %54 = math.exp %53 : vector<2x128xf32>
    %cst_13 = arith.constant 1.000000e+00 : f32
    %55 = vector.broadcast %cst_13 : f32 to vector<2x128xf32>
    %56 = arith.addf %55, %54 : vector<2x128xf32>
    %57 = arith.divf %55, %56 : vector<2x128xf32>
    %58 = math.tanh %52 : vector<2x128xf32>
    %59 = vector.extract_strided_slice %57 {offsets = [0, 0], sizes = [2, 32], strides = [1, 1]} : vector<2x128xf32> to vector<2x32xf32>
    %60 = vector.extract_strided_slice %57 {offsets = [0, 32], sizes = [2, 32], strides = [1, 1]} : vector<2x128xf32> to vector<2x32xf32>
    %61 = vector.extract_strided_slice %58 {offsets = [0, 64], sizes = [2, 32], strides = [1, 1]} : vector<2x128xf32> to vector<2x32xf32>
    %62 = vector.extract_strided_slice %57 {offsets = [0, 96], sizes = [2, 32], strides = [1, 1]} : vector<2x128xf32> to vector<2x32xf32>
    %63 = arith.mulf %60, %47 : vector<2x32xf32>
    %64 = arith.mulf %59, %61 : vector<2x32xf32>
    %65 = arith.addf %63, %64 : vector<2x32xf32>
    %66 = math.tanh %65 : vector<2x32xf32>
    %67 = arith.mulf %62, %66 : vector<2x32xf32>
    %68 = vector.extract_strided_slice %11 {offsets = [6, 0], sizes = [2, 128], strides = [1, 1]} : vector<16x128xf32> to vector<2x128xf32>
    %cst_14 = arith.constant dense<0.000000e+00> : vector<2x128xf32>
    %69 = tpu.matmul %67, %3, %cst_14 {dimension_numbers = #tpu.dot_dimension_numbers<[1], [0], [0], [1], [0, 0, 1, 1], [], []>} : vector<2x32xf32>, vector<32x128xf32>, vector<2x128xf32> -> vector<2x128xf32>
    %70 = arith.addf %68, %69 : vector<2x128xf32>
    %71 = arith.negf %70 : vector<2x128xf32>
    %72 = math.exp %71 : vector<2x128xf32>
    %cst_15 = arith.constant 1.000000e+00 : f32
    %73 = vector.broadcast %cst_15 : f32 to vector<2x128xf32>
    %74 = arith.addf %73, %72 : vector<2x128xf32>
    %75 = arith.divf %73, %74 : vector<2x128xf32>
    %76 = math.tanh %70 : vector<2x128xf32>
    %77 = vector.extract_strided_slice %75 {offsets = [0, 0], sizes = [2, 32], strides = [1, 1]} : vector<2x128xf32> to vector<2x32xf32>
    %78 = vector.extract_strided_slice %75 {offsets = [0, 32], sizes = [2, 32], strides = [1, 1]} : vector<2x128xf32> to vector<2x32xf32>
    %79 = vector.extract_strided_slice %76 {offsets = [0, 64], sizes = [2, 32], strides = [1, 1]} : vector<2x128xf32> to vector<2x32xf32>
    %80 = vector.extract_strided_slice %75 {offsets = [0, 96], sizes = [2, 32], strides = [1, 1]} : vector<2x128xf32> to vector<2x32xf32>
    %81 = arith.mulf %78, %65 : vector<2x32xf32>
    %82 = arith.mulf %77, %79 : vector<2x32xf32>
    %83 = arith.addf %81, %82 : vector<2x32xf32>
    %84 = math.tanh %83 : vector<2x32xf32>
    %85 = arith.mulf %80, %84 : vector<2x32xf32>
    %86 = vector.extract_strided_slice %11 {offsets = [8, 0], sizes = [2, 128], strides = [1, 1]} : vector<16x128xf32> to vector<2x128xf32>
    %cst_16 = arith.constant dense<0.000000e+00> : vector<2x128xf32>
    %87 = tpu.matmul %85, %3, %cst_16 {dimension_numbers = #tpu.dot_dimension_numbers<[1], [0], [0], [1], [0, 0, 1, 1], [], []>} : vector<2x32xf32>, vector<32x128xf32>, vector<2x128xf32> -> vector<2x128xf32>
    %88 = arith.addf %86, %87 : vector<2x128xf32>
    %89 = arith.negf %88 : vector<2x128xf32>
    %90 = math.exp %89 : vector<2x128xf32>
    %cst_17 = arith.constant 1.000000e+00 : f32
    %91 = vector.broadcast %cst_17 : f32 to vector<2x128xf32>
    %92 = arith.addf %91, %90 : vector<2x128xf32>
    %93 = arith.divf %91, %92 : vector<2x128xf32>
    %94 = math.tanh %88 : vector<2x128xf32>
    %95 = vector.extract_strided_slice %93 {offsets = [0, 0], sizes = [2, 32], strides = [1, 1]} : vector<2x128xf32> to vector<2x32xf32>
    %96 = vector.extract_strided_slice %93 {offsets = [0, 32], sizes = [2, 32], strides = [1, 1]} : vector<2x128xf32> to vector<2x32xf32>
    %97 = vector.extract_strided_slice %94 {offsets = [0, 64], sizes = [2, 32], strides = [1, 1]} : vector<2x128xf32> to vector<2x32xf32>
    %98 = vector.extract_strided_slice %93 {offsets = [0, 96], sizes = [2, 32], strides = [1, 1]} : vector<2x128xf32> to vector<2x32xf32>
    %99 = arith.mulf %96, %83 : vector<2x32xf32>
    %100 = arith.mulf %95, %97 : vector<2x32xf32>
    %101 = arith.addf %99, %100 : vector<2x32xf32>
    %102 = math.tanh %101 : vector<2x32xf32>
    %103 = arith.mulf %98, %102 : vector<2x32xf32>
    %104 = vector.extract_strided_slice %11 {offsets = [10, 0], sizes = [2, 128], strides = [1, 1]} : vector<16x128xf32> to vector<2x128xf32>
    %cst_18 = arith.constant dense<0.000000e+00> : vector<2x128xf32>
    %105 = tpu.matmul %103, %3, %cst_18 {dimension_numbers = #tpu.dot_dimension_numbers<[1], [0], [0], [1], [0, 0, 1, 1], [], []>} : vector<2x32xf32>, vector<32x128xf32>, vector<2x128xf32> -> vector<2x128xf32>
    %106 = arith.addf %104, %105 : vector<2x128xf32>
    %107 = arith.negf %106 : vector<2x128xf32>
    %108 = math.exp %107 : vector<2x128xf32>
    %cst_19 = arith.constant 1.000000e+00 : f32
    %109 = vector.broadcast %cst_19 : f32 to vector<2x128xf32>
    %110 = arith.addf %109, %108 : vector<2x128xf32>
    %111 = arith.divf %109, %110 : vector<2x128xf32>
    %112 = math.tanh %106 : vector<2x128xf32>
    %113 = vector.extract_strided_slice %111 {offsets = [0, 0], sizes = [2, 32], strides = [1, 1]} : vector<2x128xf32> to vector<2x32xf32>
    %114 = vector.extract_strided_slice %111 {offsets = [0, 32], sizes = [2, 32], strides = [1, 1]} : vector<2x128xf32> to vector<2x32xf32>
    %115 = vector.extract_strided_slice %112 {offsets = [0, 64], sizes = [2, 32], strides = [1, 1]} : vector<2x128xf32> to vector<2x32xf32>
    %116 = vector.extract_strided_slice %111 {offsets = [0, 96], sizes = [2, 32], strides = [1, 1]} : vector<2x128xf32> to vector<2x32xf32>
    %117 = arith.mulf %114, %101 : vector<2x32xf32>
    %118 = arith.mulf %113, %115 : vector<2x32xf32>
    %119 = arith.addf %117, %118 : vector<2x32xf32>
    %120 = math.tanh %119 : vector<2x32xf32>
    %121 = arith.mulf %116, %120 : vector<2x32xf32>
    %122 = vector.extract_strided_slice %11 {offsets = [12, 0], sizes = [2, 128], strides = [1, 1]} : vector<16x128xf32> to vector<2x128xf32>
    %cst_20 = arith.constant dense<0.000000e+00> : vector<2x128xf32>
    %123 = tpu.matmul %121, %3, %cst_20 {dimension_numbers = #tpu.dot_dimension_numbers<[1], [0], [0], [1], [0, 0, 1, 1], [], []>} : vector<2x32xf32>, vector<32x128xf32>, vector<2x128xf32> -> vector<2x128xf32>
    %124 = arith.addf %122, %123 : vector<2x128xf32>
    %125 = arith.negf %124 : vector<2x128xf32>
    %126 = math.exp %125 : vector<2x128xf32>
    %cst_21 = arith.constant 1.000000e+00 : f32
    %127 = vector.broadcast %cst_21 : f32 to vector<2x128xf32>
    %128 = arith.addf %127, %126 : vector<2x128xf32>
    %129 = arith.divf %127, %128 : vector<2x128xf32>
    %130 = math.tanh %124 : vector<2x128xf32>
    %131 = vector.extract_strided_slice %129 {offsets = [0, 0], sizes = [2, 32], strides = [1, 1]} : vector<2x128xf32> to vector<2x32xf32>
    %132 = vector.extract_strided_slice %129 {offsets = [0, 32], sizes = [2, 32], strides = [1, 1]} : vector<2x128xf32> to vector<2x32xf32>
    %133 = vector.extract_strided_slice %130 {offsets = [0, 64], sizes = [2, 32], strides = [1, 1]} : vector<2x128xf32> to vector<2x32xf32>
    %134 = vector.extract_strided_slice %129 {offsets = [0, 96], sizes = [2, 32], strides = [1, 1]} : vector<2x128xf32> to vector<2x32xf32>
    %135 = arith.mulf %132, %119 : vector<2x32xf32>
    %136 = arith.mulf %131, %133 : vector<2x32xf32>
    %137 = arith.addf %135, %136 : vector<2x32xf32>
    %138 = math.tanh %137 : vector<2x32xf32>
    %139 = arith.mulf %134, %138 : vector<2x32xf32>
    %140 = vector.extract_strided_slice %11 {offsets = [14, 0], sizes = [2, 128], strides = [1, 1]} : vector<16x128xf32> to vector<2x128xf32>
    %cst_22 = arith.constant dense<0.000000e+00> : vector<2x128xf32>
    %141 = tpu.matmul %139, %3, %cst_22 {dimension_numbers = #tpu.dot_dimension_numbers<[1], [0], [0], [1], [0, 0, 1, 1], [], []>} : vector<2x32xf32>, vector<32x128xf32>, vector<2x128xf32> -> vector<2x128xf32>
    %142 = arith.addf %140, %141 : vector<2x128xf32>
    %143 = arith.negf %142 : vector<2x128xf32>
    %144 = math.exp %143 : vector<2x128xf32>
    %cst_23 = arith.constant 1.000000e+00 : f32
    %145 = vector.broadcast %cst_23 : f32 to vector<2x128xf32>
    %146 = arith.addf %145, %144 : vector<2x128xf32>
    %147 = arith.divf %145, %146 : vector<2x128xf32>
    %148 = math.tanh %142 : vector<2x128xf32>
    %149 = vector.extract_strided_slice %147 {offsets = [0, 0], sizes = [2, 32], strides = [1, 1]} : vector<2x128xf32> to vector<2x32xf32>
    %150 = vector.extract_strided_slice %147 {offsets = [0, 32], sizes = [2, 32], strides = [1, 1]} : vector<2x128xf32> to vector<2x32xf32>
    %151 = vector.extract_strided_slice %148 {offsets = [0, 64], sizes = [2, 32], strides = [1, 1]} : vector<2x128xf32> to vector<2x32xf32>
    %152 = vector.extract_strided_slice %147 {offsets = [0, 96], sizes = [2, 32], strides = [1, 1]} : vector<2x128xf32> to vector<2x32xf32>
    %153 = arith.mulf %150, %137 : vector<2x32xf32>
    %154 = arith.mulf %149, %151 : vector<2x32xf32>
    %155 = arith.addf %153, %154 : vector<2x32xf32>
    %156 = math.tanh %155 : vector<2x32xf32>
    %157 = arith.mulf %152, %156 : vector<2x32xf32>
    %c0_24 = arith.constant 0 : index
    %c0_25 = arith.constant 0 : index
    %158 = vector.load %arg4[%c0_24, %c0_25] : memref<34x32xf32, #tpu.memory_space<vmem>>, vector<34x32xf32>
    %159 = vector.extract_strided_slice %158 {offsets = [0, 0], sizes = [32, 32], strides = [1, 1]} : vector<34x32xf32> to vector<32x32xf32>
    %160 = vector.extract_strided_slice %158 {offsets = [32, 0], sizes = [1, 32], strides = [1, 1]} : vector<34x32xf32> to vector<1x32xf32>
    %161 = vector.extract_strided_slice %158 {offsets = [33, 0], sizes = [1, 32], strides = [1, 1]} : vector<34x32xf32> to vector<1x32xf32>
    %cst_26 = arith.constant dense<0.000000e+00> : vector<2x32xf32>
    %162 = tpu.matmul %157, %159, %cst_26 {dimension_numbers = #tpu.dot_dimension_numbers<[1], [0], [0], [1], [0, 0, 1, 1], [], []>} : vector<2x32xf32>, vector<32x32xf32>, vector<2x32xf32> -> vector<2x32xf32>
    %cst_27 = arith.constant dense<0.000000e+00> : vector<32xf32>
    %163 = vector.multi_reduction <add>, %162, %cst_27 [0] : vector<2x32xf32> to vector<32xf32>
    %164 = vector.shape_cast %163 : vector<32xf32> to vector<1x32xf32>
    %cst_28 = arith.constant 2.000000e+00 : f32
    %165 = vector.broadcast %cst_28 : f32 to vector<1x32xf32>
    %166 = arith.divf %164, %165 : vector<1x32xf32>
    %167 = vector.broadcast %166 : vector<1x32xf32> to vector<2x32xf32>
    %168 = arith.subf %162, %167 : vector<2x32xf32>
    %169 = arith.mulf %168, %168 : vector<2x32xf32>
    %cst_29 = arith.constant dense<0.000000e+00> : vector<32xf32>
    %170 = vector.multi_reduction <add>, %169, %cst_29 [0] : vector<2x32xf32> to vector<32xf32>
    %171 = vector.shape_cast %170 : vector<32xf32> to vector<1x32xf32>
    %cst_30 = arith.constant 2.000000e+00 : f32
    %172 = vector.broadcast %cst_30 : f32 to vector<1x32xf32>
    %173 = arith.divf %171, %172 : vector<1x32xf32>
    %174 = vector.broadcast %166 : vector<1x32xf32> to vector<2x32xf32>
    %175 = arith.subf %162, %174 : vector<2x32xf32>
    %cst_31 = arith.constant 9.99999974E-6 : f32
    %176 = vector.broadcast %cst_31 : f32 to vector<1x32xf32>
    %177 = arith.addf %173, %176 : vector<1x32xf32>
    %178 = math.rsqrt %177 : vector<1x32xf32>
    %179 = vector.broadcast %178 : vector<1x32xf32> to vector<2x32xf32>
    %180 = arith.mulf %175, %179 : vector<2x32xf32>
    %181 = vector.broadcast %160 : vector<1x32xf32> to vector<2x32xf32>
    %182 = arith.mulf %180, %181 : vector<2x32xf32>
    %183 = vector.broadcast %161 : vector<1x32xf32> to vector<2x32xf32>
    %184 = arith.addf %182, %183 : vector<2x32xf32>
    %cst_32 = arith.constant 0.000000e+00 : f32
    %185 = vector.broadcast %cst_32 : f32 to vector<2x32xf32>
    %186 = arith.maximumf %184, %185 : vector<2x32xf32>
    %c0_33 = arith.constant 0 : index
    %c0_34 = arith.constant 0 : index
    %187 = vector.load %arg5[%c0_33, %c0_34] : memref<34x32xf32, #tpu.memory_space<vmem>>, vector<34x32xf32>
    %188 = vector.extract_strided_slice %187 {offsets = [0, 0], sizes = [32, 32], strides = [1, 1]} : vector<34x32xf32> to vector<32x32xf32>
    %189 = vector.extract_strided_slice %187 {offsets = [32, 0], sizes = [1, 32], strides = [1, 1]} : vector<34x32xf32> to vector<1x32xf32>
    %190 = vector.extract_strided_slice %187 {offsets = [33, 0], sizes = [1, 32], strides = [1, 1]} : vector<34x32xf32> to vector<1x32xf32>
    %cst_35 = arith.constant dense<0.000000e+00> : vector<2x32xf32>
    %191 = tpu.matmul %186, %188, %cst_35 {dimension_numbers = #tpu.dot_dimension_numbers<[1], [0], [0], [1], [0, 0, 1, 1], [], []>} : vector<2x32xf32>, vector<32x32xf32>, vector<2x32xf32> -> vector<2x32xf32>
    %cst_36 = arith.constant dense<0.000000e+00> : vector<32xf32>
    %192 = vector.multi_reduction <add>, %191, %cst_36 [0] : vector<2x32xf32> to vector<32xf32>
    %193 = vector.shape_cast %192 : vector<32xf32> to vector<1x32xf32>
    %cst_37 = arith.constant 2.000000e+00 : f32
    %194 = vector.broadcast %cst_37 : f32 to vector<1x32xf32>
    %195 = arith.divf %193, %194 : vector<1x32xf32>
    %196 = vector.broadcast %195 : vector<1x32xf32> to vector<2x32xf32>
    %197 = arith.subf %191, %196 : vector<2x32xf32>
    %198 = arith.mulf %197, %197 : vector<2x32xf32>
    %cst_38 = arith.constant dense<0.000000e+00> : vector<32xf32>
    %199 = vector.multi_reduction <add>, %198, %cst_38 [0] : vector<2x32xf32> to vector<32xf32>
    %200 = vector.shape_cast %199 : vector<32xf32> to vector<1x32xf32>
    %cst_39 = arith.constant 2.000000e+00 : f32
    %201 = vector.broadcast %cst_39 : f32 to vector<1x32xf32>
    %202 = arith.divf %200, %201 : vector<1x32xf32>
    %203 = vector.broadcast %195 : vector<1x32xf32> to vector<2x32xf32>
    %204 = arith.subf %191, %203 : vector<2x32xf32>
    %cst_40 = arith.constant 9.99999974E-6 : f32
    %205 = vector.broadcast %cst_40 : f32 to vector<1x32xf32>
    %206 = arith.addf %202, %205 : vector<1x32xf32>
    %207 = math.rsqrt %206 : vector<1x32xf32>
    %208 = vector.broadcast %207 : vector<1x32xf32> to vector<2x32xf32>
    %209 = arith.mulf %204, %208 : vector<2x32xf32>
    %210 = vector.broadcast %189 : vector<1x32xf32> to vector<2x32xf32>
    %211 = arith.mulf %209, %210 : vector<2x32xf32>
    %212 = vector.broadcast %190 : vector<1x32xf32> to vector<2x32xf32>
    %213 = arith.addf %211, %212 : vector<2x32xf32>
    %cst_41 = arith.constant 0.000000e+00 : f32
    %214 = vector.broadcast %cst_41 : f32 to vector<2x32xf32>
    %215 = arith.maximumf %213, %214 : vector<2x32xf32>
    %c0_42 = arith.constant 0 : index
    %c0_43 = arith.constant 0 : index
    %216 = vector.load %arg6[%c0_42, %c0_43] : memref<33x8xf32, #tpu.memory_space<vmem>>, vector<33x8xf32>
    %217 = vector.extract_strided_slice %216 {offsets = [0, 0], sizes = [32, 8], strides = [1, 1]} : vector<33x8xf32> to vector<32x8xf32>
    %218 = vector.extract_strided_slice %216 {offsets = [32, 0], sizes = [1, 8], strides = [1, 1]} : vector<33x8xf32> to vector<1x8xf32>
    %cst_44 = arith.constant dense<0.000000e+00> : vector<2x8xf32>
    %219 = tpu.matmul %215, %217, %cst_44 {dimension_numbers = #tpu.dot_dimension_numbers<[1], [0], [0], [1], [0, 0, 1, 1], [], []>} : vector<2x32xf32>, vector<32x8xf32>, vector<2x8xf32> -> vector<2x8xf32>
    %220 = vector.broadcast %218 : vector<1x8xf32> to vector<2x8xf32>
    %221 = arith.addf %219, %220 : vector<2x8xf32>
    %c0_45 = arith.constant 0 : index
    %c0_46 = arith.constant 0 : index
    %222 = vector.load %arg7[%c0_45, %c0_46] : memref<2x8xf32, #tpu.memory_space<vmem>>, vector<2x8xf32>
    tpu.vector_store %arg7[%c0_45, %c0_46], %221 {strides = array<i32>} : memref<2x8xf32, #tpu.memory_space<vmem>>, vector<2x8xf32>,
    return
  }
  func.func @transform_0(%arg0: i32) -> (i32, i32) {
    %c0_i32 = arith.constant 0 : i32
    %c0_i32_0 = arith.constant 0 : i32
    %c0_i32_1 = arith.constant 0 : i32
    return %c0_i32, %c0_i32_0 : i32, i32
  }
  func.func @transform_1(%arg0: i32) -> (i32, i32) {
    %c0_i32 = arith.constant 0 : i32
    %c0_i32_0 = arith.constant 0 : i32
    %c0_i32_1 = arith.constant 0 : i32
    return %c0_i32, %c0_i32_0 : i32, i32
  }
  func.func @transform_2(%arg0: i32) -> (i32, i32) {
    %c0_i32 = arith.constant 0 : i32
    %c0_i32_0 = arith.constant 0 : i32
    %c0_i32_1 = arith.constant 0 : i32
    return %c0_i32, %c0_i32_0 : i32, i32
  }
  func.func @transform_3(%arg0: i32) -> (i32, i32) {
    %c0_i32 = arith.constant 0 : i32
    %c0_i32_0 = arith.constant 0 : i32
    %c0_i32_1 = arith.constant 0 : i32
    return %c0_i32, %c0_i32_0 : i32, i32
  }
  func.func @transform_4(%arg0: i32) -> (i32, i32) {
    %c0_i32 = arith.constant 0 : i32
    %c0_i32_0 = arith.constant 0 : i32
    %c0_i32_1 = arith.constant 0 : i32
    return %c0_i32, %c0_i32_0 : i32, i32
  }
  func.func @transform_5(%arg0: i32) -> (i32, i32) {
    %c0_i32 = arith.constant 0 : i32
    %c0_i32_0 = arith.constant 0 : i32
    %c0_i32_1 = arith.constant 0 : i32
    return %c0_i32, %c0_i32_0 : i32, i32
  }
  func.func @transform_6(%arg0: i32) -> (i32, i32) {
    %c0_i32 = arith.constant 0 : i32
    %c0_i32_0 = arith.constant 0 : i32
    %c0_i32_1 = arith.constant 0 : i32
    return %c0_i32, %c0_i32_0 : i32, i32
  }
}

</mosaic_0001>

<llo_original>
// kernel: mlp_rnn_forward.1
$region0: #{mlp_rnn_forward.1}
  #allocation0 [shape = 'u32[]', space=smem, size = 0x4, offset = 0x4, fixed_abs, tag = 'smem constant byte address 0x4 - core index']
  #allocation1 [shape = 'u32[144,128]{1,0:T(1,128)}', space=vmem, size = 0x12000, scoped, tag = 'internal scratch']
  %s0 = inlined_call_operand.vmem [shape: f32[16,4], index: 0, kind: input, shape index: {}]
  %s1 = inlined_call_operand.vmem [shape: f32[16,2], index: 1, kind: input, shape index: {}]
  %s2 = inlined_call_operand.vmem [shape: f32[39,128], index: 2, kind: input, shape index: {}]
  %s3 = inlined_call_operand.vmem [shape: f32[34,32], index: 3, kind: input, shape index: {}]
  %s4 = inlined_call_operand.vmem [shape: f32[34,32], index: 4, kind: input, shape index: {}]
  %s5 = inlined_call_operand.vmem [shape: f32[33,8], index: 5, kind: input, shape index: {}]
  %s6 = inlined_call_operand.hbm [shape: f32[2,8], index: 6, kind: output, shape index: {}]
  %s7 = sld [smem:[#allocation0]]
  $region34: #{mlp_rnn_forward.1} parent=0
    _
  %s9 = ssub.s32 1, %s7
  %s10 = scalar_select 0, %s9, %s7
  $region1: #{mlp_rnn_forward.1} parent=0
    #allocation2 [shape = 'u8[1024]{0}', space=vmem, size = 0x400, scoped, tag = 'output window, operand 0, single buffered']
    #allocation3 [shape = 's32[1]{0}', space=sflag, size = 0x4, scoped, tag = 'scoped memory for mlp_rnn_forward.1']
    %11 = vsyncpa [#allocation3], 0
    // Predicated region
    $region2: #{mlp_rnn_forward.1} parent=1 // pred_check
      _
    $region3: #{mlp_rnn_forward.1} parent=1 // pred_check_branch
      %13 = sbr.rel (0) target = $region5
    $region4: #{mlp_rnn_forward.1} parent=1 // pred_region
      _
    $region5: #{mlp_rnn_forward.1} parent=1 // pred_fallthru
      _
    // Predicated region
    $region6: #{mlp_rnn_forward.1} parent=1 // pred_check
      _
    $region7: #{mlp_rnn_forward.1} parent=1 // pred_check_branch
      %15 = sbr.rel (0) target = $region9
    $region8: #{mlp_rnn_forward.1} parent=1 // pred_region
      _
    $region9: #{mlp_rnn_forward.1} parent=1 // pred_fallthru
      _
    // Predicated region
    $region10: #{mlp_rnn_forward.1} parent=1 // pred_check
      _
    $region11: #{mlp_rnn_forward.1} parent=1 // pred_check_branch
      %17 = sbr.rel (0) target = $region13
    $region12: #{mlp_rnn_forward.1} parent=1 // pred_region
      _
    $region13: #{mlp_rnn_forward.1} parent=1 // pred_fallthru
      _
    // Predicated region
    $region14: #{mlp_rnn_forward.1} parent=1 // pred_check
      _
    $region15: #{mlp_rnn_forward.1} parent=1 // pred_check_branch
      %19 = sbr.rel (0) target = $region17
    $region16: #{mlp_rnn_forward.1} parent=1 // pred_region
      _
    $region17: #{mlp_rnn_forward.1} parent=1 // pred_fallthru
      _
    // Predicated region
    $region18: #{mlp_rnn_forward.1} parent=1 // pred_check
      _
    $region19: #{mlp_rnn_forward.1} parent=1 // pred_check_branch
      %21 = sbr.rel (0) target = $region21
    $region20: #{mlp_rnn_forward.1} parent=1 // pred_region
      _
    $region21: #{mlp_rnn_forward.1} parent=1 // pred_fallthru
      _
    // Predicated region
    $region22: #{mlp_rnn_forward.1} parent=1 // pred_check
      _
    $region23: #{mlp_rnn_forward.1} parent=1 // pred_check_branch
      %23 = sbr.rel (0) target = $region25
    $region24: #{mlp_rnn_forward.1} parent=1 // pred_region
      _
    $region25: #{mlp_rnn_forward.1} parent=1 // pred_fallthru
      _
    %v24 = vld [vmem:[%s2] sm:$0xff]
    %v25 = vld [vmem:[%s2 + $0x8] sm:$0xff]
    %v26 = vld [vmem:[%s2 + $0x10] sm:$0xff]
    %v27 = vld [vmem:[%s2 + $0x18] sm:$0xff]
    %v28 = vld [vmem:[%s2 + $0x20] sm:$0x7f]
    %v29 = vld [vmem:[%s0] sm:$0xff]
    %v30 = vld [vmem:[%s0 + $0x8] sm:$0xff]
    %v31 = vld [vmem:[%s1] sm:$0xff]
    %v32 = vld [vmem:[%s1 + $0x8] sm:$0xff]
    %v34 = vrot.slane %v24, 4
    %vm35 = vcmask 15360
    %v37 = vsel %vm35, %v31, 0
    %v40 = vsel %vm35, %v32, 0
    %vm42 = vcmask 1041408
    %v43 = vsel %vm42, %v34, 0
    %45 = vmatprep.subr.mxu0 0.0
    %46 = vmatpush1.msra.mxu0 %v43
    %47 = vmatprep.subr.mxu0 0.0
    %48 = vmatpush1.msra.mxu0 0.0
    %49 = vmatprep.subr.mxu0 0.0
    %50 = vmatpush1.msra.mxu0 0.0
    %51 = vmatprep.subr.mxu0 0.0
    %52 = vmatpush1.msra.mxu0 0.0
    %53 = vmatprep.subr.mxu0 0.0
    %54 = vmatpush1.msra.mxu0 0.0
    %55 = vmatprep.subr.mxu0 0.0
    %56 = vmatpush1.msra.mxu0 0.0
    %57 = vmatprep.subr.mxu0 0.0
    %58 = vmatpush1.msra.mxu0 0.0
    %59 = vmatprep.subr.mxu0 0.0
    %60 = vmatpush1.msra.mxu0 0.0
    %61 = vmatprep.subr.mxu0 0.0
    %62 = vmatpush1.msra.mxu0 0.0
    %63 = vmatprep.subr.mxu0 0.0
    %64 = vmatpush1.msra.mxu0 0.0
    %65 = vmatprep.subr.mxu0 0.0
    %66 = vmatpush1.msra.mxu0 0.0
    %67 = vmatprep.subr.mxu0 0.0
    %68 = vmatpush1.msra.mxu0 0.0
    %69 = vmatprep.subr.mxu0 0.0
    %70 = vmatpush1.msra.mxu0 0.0
    %71 = vmatprep.subr.mxu0 0.0
    %72 = vmatpush1.msra.mxu0 0.0
    %73 = vmatprep.subr.mxu0 0.0
    %74 = vmatpush1.msra.mxu0 0.0
    %75 = vmatprep.subr.mxu0 0.0
    %76 = vmatpush1.msra.mxu0 0.0
    %77 = vmatprep.subr.mxu0 0.0
    %78 = vmatpush1.msra.mxu0 0.0
    %79 = vmatprep.subr.mxu0 0.0
    %80 = vmatpush1.msra.mxu0 0.0
    %81 = vmatprep.subr.mxu0 0.0
    %82 = vmatpush1.msra.mxu0 0.0
    %83 = vmatprep.subr.mxu0 0.0
    %84 = vmatpush1.msra.mxu0 0.0
    %85 = vmatprep.subr.mxu0 0.0
    %86 = vmatpush1.msra.mxu0 0.0
    %87 = vmatprep.subr.mxu0 0.0
    %88 = vmatpush1.msra.mxu0 0.0
    %89 = vmatprep.subr.mxu0 0.0
    %90 = vmatpush1.msra.mxu0 0.0
    %91 = vmatprep.subr.mxu0 0.0
    %92 = vmatpush1.msra.mxu0 0.0
    %93 = vmatprep.subr.mxu0 0.0
    %94 = vmatpush1.msra.mxu0 0.0
    %95 = vmatprep.subr.mxu0 0.0
    %96 = vmatpush1.msra.mxu0 0.0
    %97 = vmatprep.subr.mxu0 0.0
    %98 = vmatpush1.msra.mxu0 0.0
    %99 = vmatprep.subr.mxu0 0.0
    %100 = vmatpush1.msra.mxu0 0.0
    %101 = vmatprep.subr.mxu0 0.0
    %102 = vmatpush1.msra.mxu0 0.0
    %103 = vmatprep.subr.mxu0 0.0
    %104 = vmatpush1.msra.mxu0 0.0
    %105 = vmatprep.subr.mxu0 0.0
    %106 = vmatpush1.msra.mxu0 0.0
    %107 = vmatprep.subr.mxu0 0.0
    %108 = vmatpush1.msra.mxu0 0.0
    %109 = vmatprep.mubr.f32.mxu0 0.0
    %110 = vmatmul.mubr.f32.gmra.mrb[0].mxu0 %v37
    %v111 = vpop.f32.mrb[0].mxu0
    %v112 = vadd.f32 0.0, %v111
    %v113 = vpop.f32.mrb[0].mxu0
    %114 = vmatprep.mubr.f32.mxu0 0.0
    %115 = vmatmul.mubr.f32.gmra.mrb[0].mxu0 %v40
    %v116 = vpop.f32.mrb[0].mxu0
    %v117 = vadd.f32 0.0, %v116
    %v118 = vpop.f32.mrb[0].mxu0
    %119 = vdwg.mxu0
    %vm120 = vcmask 31744
    %v122 = vsel %vm120, %v29, 0
    %v125 = vsel %vm120, %v30, 0
    %vm127 = vcmask 1043456
    %v128 = vsel %vm127, %v24, 0
    %130 = vmatprep.subr.mxu0 0.0
    %131 = vmatpush1.msra.mxu0 %v128
    %132 = vmatprep.subr.mxu0 0.0
    %133 = vmatpush1.msra.mxu0 0.0
    %134 = vmatprep.subr.mxu0 0.0
    %135 = vmatpush1.msra.mxu0 0.0
    %136 = vmatprep.subr.mxu0 0.0
    %137 = vmatpush1.msra.mxu0 0.0
    %138 = vmatprep.subr.mxu0 0.0
    %139 = vmatpush1.msra.mxu0 0.0
    %140 = vmatprep.subr.mxu0 0.0
    %141 = vmatpush1.msra.mxu0 0.0
    %142 = vmatprep.subr.mxu0 0.0
    %143 = vmatpush1.msra.mxu0 0.0
    %144 = vmatprep.subr.mxu0 0.0
    %145 = vmatpush1.msra.mxu0 0.0
    %146 = vmatprep.subr.mxu0 0.0
    %147 = vmatpush1.msra.mxu0 0.0
    %148 = vmatprep.subr.mxu0 0.0
    %149 = vmatpush1.msra.mxu0 0.0
    %150 = vmatprep.subr.mxu0 0.0
    %151 = vmatpush1.msra.mxu0 0.0
    %152 = vmatprep.subr.mxu0 0.0
    %153 = vmatpush1.msra.mxu0 0.0
    %154 = vmatprep.subr.mxu0 0.0
    %155 = vmatpush1.msra.mxu0 0.0
    %156 = vmatprep.subr.mxu0 0.0
    %157 = vmatpush1.msra.mxu0 0.0
    %158 = vmatprep.subr.mxu0 0.0
    %159 = vmatpush1.msra.mxu0 0.0
    %160 = vmatprep.subr.mxu0 0.0
    %161 = vmatpush1.msra.mxu0 0.0
    %162 = vmatprep.subr.mxu0 0.0
    %163 = vmatpush1.msra.mxu0 0.0
    %164 = vmatprep.subr.mxu0 0.0
    %165 = vmatpush1.msra.mxu0 0.0
    %166 = vmatprep.subr.mxu0 0.0
    %167 = vmatpush1.msra.mxu0 0.0
    %168 = vmatprep.subr.mxu0 0.0
    %169 = vmatpush1.msra.mxu0 0.0
    %170 = vmatprep.subr.mxu0 0.0
    %171 = vmatpush1.msra.mxu0 0.0
    %172 = vmatprep.subr.mxu0 0.0
    %173 = vmatpush1.msra.mxu0 0.0
    %174 = vmatprep.subr.mxu0 0.0
    %175 = vmatpush1.msra.mxu0 0.0
    %176 = vmatprep.subr.mxu0 0.0
    %177 = vmatpush1.msra.mxu0 0.0
    %178 = vmatprep.subr.mxu0 0.0
    %179 = vmatpush1.msra.mxu0 0.0
    %180 = vmatprep.subr.mxu0 0.0
    %181 = vmatpush1.msra.mxu0 0.0
    %182 = vmatprep.subr.mxu0 0.0
    %183 = vmatpush1.msra.mxu0 0.0
    %184 = vmatprep.subr.mxu0 0.0
    %185 = vmatpush1.msra.mxu0 0.0
    %186 = vmatprep.subr.mxu0 0.0
    %187 = vmatpush1.msra.mxu0 0.0
    %188 = vmatprep.subr.mxu0 0.0
    %189 = vmatpush1.msra.mxu0 0.0
    %190 = vmatprep.subr.mxu0 0.0
    %191 = vmatpush1.msra.mxu0 0.0
    %192 = vmatprep.subr.mxu0 0.0
    %193 = vmatpush1.msra.mxu0 0.0
    %194 = vmatprep.mubr.f32.mxu0 0.0
    %195 = vmatmul.mubr.f32.gmra.mrb[0].mxu0 %v122
    %v196 = vpop.f32.mrb[0].mxu0
    %v197 = vadd.f32 %v112, %v196
    %v198 = vpop.f32.mrb[0].mxu0
    %199 = vmatprep.mubr.f32.mxu0 0.0
    %200 = vmatmul.mubr.f32.gmra.mrb[0].mxu0 %v125
    %v201 = vpop.f32.mrb[0].mxu0
    %v202 = vadd.f32 %v117, %v201
    %v203 = vpop.f32.mrb[0].mxu0
    %204 = vdwg.mxu0
    %v205 = vlaneseq
    %v206 = vshrl.u32 %v205, 7
    %v207 = vsub.s32 6, %v206
    %v208 = vrot.slane %v28, %v207
    %v209 = vadd.f32 %v197, %v208
    %v210 = vadd.f32 %v202, %v208
    %v215 = vrot.slane %v24, 6
    %v216 = vrot.slane %v25, 6
    %v217 = vsel %vm42, %v215, %v216
    %v218 = vrot.slane %v26, 6
    %v219 = vsel %vm42, %v216, %v218
    %v220 = vrot.slane %v27, 6
    %v221 = vsel %vm42, %v218, %v220
    %v222 = vrot.slane %v28, 6
    %v223 = vsel %vm42, %v220, %v222
    %vm228 = vcmask 261120
    %v230 = vsel %vm228, 0.0, 0
    %232 = vmatprep.subr.mxu0 0.0
    %233 = vmatpush1.msra.mxu0 %v217
    %234 = vmatprep.subr.mxu0 0.0
    %235 = vmatpush1.msra.mxu0 %v219
    %236 = vmatprep.subr.mxu0 0.0
    %237 = vmatpush1.msra.mxu0 %v221
    %238 = vmatprep.subr.mxu0 0.0
    %239 = vmatpush1.msra.mxu0 %v223
    %240 = vmatprep.subr.mxu0 0.0
    %241 = vmatpush1.msra.mxu0 0.0
    %242 = vmatprep.subr.mxu0 0.0
    %243 = vmatpush1.msra.mxu0 0.0
    %244 = vmatprep.subr.mxu0 0.0
    %245 = vmatpush1.msra.mxu0 0.0
    %246 = vmatprep.subr.mxu0 0.0
    %247 = vmatpush1.msra.mxu0 0.0
    %248 = vmatprep.subr.mxu0 0.0
    %249 = vmatpush1.msra.mxu0 0.0
    %250 = vmatprep.subr.mxu0 0.0
    %251 = vmatpush1.msra.mxu0 0.0
    %252 = vmatprep.subr.mxu0 0.0
    %253 = vmatpush1.msra.mxu0 0.0
    %254 = vmatprep.subr.mxu0 0.0
    %255 = vmatpush1.msra.mxu0 0.0
    %256 = vmatprep.subr.mxu0 0.0
    %257 = vmatpush1.msra.mxu0 0.0
    %258 = vmatprep.subr.mxu0 0.0
    %259 = vmatpush1.msra.mxu0 0.0
    %260 = vmatprep.subr.mxu0 0.0
    %261 = vmatpush1.msra.mxu0 0.0
    %262 = vmatprep.subr.mxu0 0.0
    %263 = vmatpush1.msra.mxu0 0.0
    %264 = vmatprep.subr.mxu0 0.0
    %265 = vmatpush1.msra.mxu0 0.0
    %266 = vmatprep.subr.mxu0 0.0
    %267 = vmatpush1.msra.mxu0 0.0
    %268 = vmatprep.subr.mxu0 0.0
    %269 = vmatpush1.msra.mxu0 0.0
    %270 = vmatprep.subr.mxu0 0.0
    %271 = vmatpush1.msra.mxu0 0.0
    %272 = vmatprep.subr.mxu0 0.0
    %273 = vmatpush1.msra.mxu0 0.0
    %274 = vmatprep.subr.mxu0 0.0
    %275 = vmatpush1.msra.mxu0 0.0
    %276 = vmatprep.subr.mxu0 0.0
    %277 = vmatpush1.msra.mxu0 0.0
    %278 = vmatprep.subr.mxu0 0.0
    %279 = vmatpush1.msra.mxu0 0.0
    %280 = vmatprep.subr.mxu0 0.0
    %281 = vmatpush1.msra.mxu0 0.0
    %282 = vmatprep.subr.mxu0 0.0
    %283 = vmatpush1.msra.mxu0 0.0
    %284 = vmatprep.subr.mxu0 0.0
    %285 = vmatpush1.msra.mxu0 0.0
    %286 = vmatprep.subr.mxu0 0.0
    %287 = vmatpush1.msra.mxu0 0.0
    %288 = vmatprep.subr.mxu0 0.0
    %289 = vmatpush1.msra.mxu0 0.0
    %290 = vmatprep.subr.mxu0 0.0
    %291 = vmatpush1.msra.mxu0 0.0
    %292 = vmatprep.subr.mxu0 0.0
    %293 = vmatpush1.msra.mxu0 0.0
    %294 = vmatprep.subr.mxu0 0.0
    %295 = vmatpush1.msra.mxu0 0.0
    %296 = vmatprep.mubr.f32.mxu0 0.0
    %297 = vmatmul.mubr.f32.gmra.mrb[0].mxu0 %v230
    %v298 = vpop.f32.mrb[0].mxu0
    %v299 = vadd.f32 0.0, %v298
    %v300 = vpop.f32.mrb[0].mxu0
    %301 = vdwg.mxu0
    %v302 = vadd.f32 %v209, %v299
    %v303 = vxor.u32 %v302, 2147483648
    %v304 = vmul.f32 %v303, 1.442695
    %v305 = vpow.pop %v304
    %v306 = vadd.f32 %v305, 1.0
    %v307 = vrcp.pop %v306
    %v308 = vmul.f32 1.0, %v307
    %v309 = vtanh.pop %v302
    %v310 = vmul.f32 %v308, 0.0
    %312 = vrot.lane.b32.xlu0 %v309, 64
    %v313 = vpop.permute.xlu0 %312
    %v315 = vmul.f32 %v308, %v313
    %317 = vrot.lane.b32.xlu0 %v315, 32
    %v318 = vpop.permute.xlu0 %317
    %v320 = vadd.f32 %v310, %v318
    %v321 = vtanh.pop %v320
    %323 = vrot.lane.b32.xlu0 %v321, 64
    %v324 = vpop.permute.xlu0 %323
    %v326 = vmul.f32 %v308, %v324
    %328 = vrot.lane.b32.xlu0 %v326, 32
    %v329 = vpop.permute.xlu0 %328
    %v330 = vsel %vm228, %v329, 0
    %332 = vmatprep.subr.mxu0 0.0
    %333 = vmatpush1.msra.mxu0 %v217
    %334 = vmatprep.subr.mxu0 0.0
    %335 = vmatpush1.msra.mxu0 %v219
    %336 = vmatprep.subr.mxu0 0.0
    %337 = vmatpush1.msra.mxu0 %v221
    %338 = vmatprep.subr.mxu0 0.0
    %339 = vmatpush1.msra.mxu0 %v223
    %340 = vmatprep.subr.mxu0 0.0
    %341 = vmatpush1.msra.mxu0 0.0
    %342 = vmatprep.subr.mxu0 0.0
    %343 = vmatpush1.msra.mxu0 0.0
    %344 = vmatprep.subr.mxu0 0.0
    %345 = vmatpush1.msra.mxu0 0.0
    %346 = vmatprep.subr.mxu0 0.0
    %347 = vmatpush1.msra.mxu0 0.0
    %348 = vmatprep.subr.mxu0 0.0
    %349 = vmatpush1.msra.mxu0 0.0
    %350 = vmatprep.subr.mxu0 0.0
    %351 = vmatpush1.msra.mxu0 0.0
    %352 = vmatprep.subr.mxu0 0.0
    %353 = vmatpush1.msra.mxu0 0.0
    %354 = vmatprep.subr.mxu0 0.0
    %355 = vmatpush1.msra.mxu0 0.0
    %356 = vmatprep.subr.mxu0 0.0
    %357 = vmatpush1.msra.mxu0 0.0
    %358 = vmatprep.subr.mxu0 0.0
    %359 = vmatpush1.msra.mxu0 0.0
    %360 = vmatprep.subr.mxu0 0.0
    %361 = vmatpush1.msra.mxu0 0.0
    %362 = vmatprep.subr.mxu0 0.0
    %363 = vmatpush1.msra.mxu0 0.0
    %364 = vmatprep.subr.mxu0 0.0
    %365 = vmatpush1.msra.mxu0 0.0
    %366 = vmatprep.subr.mxu0 0.0
    %367 = vmatpush1.msra.mxu0 0.0
    %368 = vmatprep.subr.mxu0 0.0
    %369 = vmatpush1.msra.mxu0 0.0
    %370 = vmatprep.subr.mxu0 0.0
    %371 = vmatpush1.msra.mxu0 0.0
    %372 = vmatprep.subr.mxu0 0.0
    %373 = vmatpush1.msra.mxu0 0.0
    %374 = vmatprep.subr.mxu0 0.0
    %375 = vmatpush1.msra.mxu0 0.0
    %376 = vmatprep.subr.mxu0 0.0
    %377 = vmatpush1.msra.mxu0 0.0
    %378 = vmatprep.subr.mxu0 0.0
    %379 = vmatpush1.msra.mxu0 0.0
    %380 = vmatprep.subr.mxu0 0.0
    %381 = vmatpush1.msra.mxu0 0.0
    %382 = vmatprep.subr.mxu0 0.0
    %383 = vmatpush1.msra.mxu0 0.0
    %384 = vmatprep.subr.mxu0 0.0
    %385 = vmatpush1.msra.mxu0 0.0
    %386 = vmatprep.subr.mxu0 0.0
    %387 = vmatpush1.msra.mxu0 0.0
    %388 = vmatprep.subr.mxu0 0.0
    %389 = vmatpush1.msra.mxu0 0.0
    %390 = vmatprep.subr.mxu0 0.0
    %391 = vmatpush1.msra.mxu0 0.0
    %392 = vmatprep.subr.mxu0 0.0
    %393 = vmatpush1.msra.mxu0 0.0
    %394 = vmatprep.subr.mxu0 0.0
    %395 = vmatpush1.msra.mxu0 0.0
    %396 = vmatprep.mubr.f32.mxu0 0.0
    %397 = vmatmul.mubr.f32.gmra.mrb[0].mxu0 %v330
    %v398 = vpop.f32.mrb[0].mxu0
    %v399 = vadd.f32 0.0, %v398
    %v400 = vpop.f32.mrb[0].mxu0
    %401 = vdwg.mxu0
    %v403 = vrot.slane %v399, 6
    %v405 = vadd.f32 %v209, %v403
    %v406 = vxor.u32 %v405, 2147483648
    %v407 = vmul.f32 %v406, 1.442695
    %v408 = vpow.pop %v407
    %v409 = vadd.f32 %v408, 1.0
    %v410 = vrcp.pop %v409
    %v411 = vmul.f32 1.0, %v410
    %v412 = vtanh.pop %v405
    %v414 = vrot.slane %v320, 6
    %v416 = vmul.f32 %v411, %v414
    %418 = vrot.lane.b32.xlu0 %v412, 64
    %v419 = vpop.permute.xlu0 %418
    %v421 = vmul.f32 %v411, %v419
    %423 = vrot.lane.b32.xlu0 %v421, 32
    %v424 = vpop.permute.xlu0 %423
    %v426 = vadd.f32 %v416, %v424
    %v427 = vtanh.pop %v426
    %429 = vrot.lane.b32.xlu0 %v427, 64
    %v430 = vpop.permute.xlu0 %429
    %v432 = vmul.f32 %v411, %v430
    %v434 = vrot.slane %v432, 2
    %435 = vrot.lane.b32.xlu0 %v434, 32
    %v436 = vpop.permute.xlu0 %435
    %v437 = vsel %vm228, %v436, 0
    %439 = vmatprep.subr.mxu0 0.0
    %440 = vmatpush1.msra.mxu0 %v217
    %441 = vmatprep.subr.mxu0 0.0
    %442 = vmatpush1.msra.mxu0 %v219
    %443 = vmatprep.subr.mxu0 0.0
    %444 = vmatpush1.msra.mxu0 %v221
    %445 = vmatprep.subr.mxu0 0.0
    %446 = vmatpush1.msra.mxu0 %v223
    %447 = vmatprep.subr.mxu0 0.0
    %448 = vmatpush1.msra.mxu0 0.0
    %449 = vmatprep.subr.mxu0 0.0
    %450 = vmatpush1.msra.mxu0 0.0
    %451 = vmatprep.subr.mxu0 0.0
    %452 = vmatpush1.msra.mxu0 0.0
    %453 = vmatprep.subr.mxu0 0.0
    %454 = vmatpush1.msra.mxu0 0.0
    %455 = vmatprep.subr.mxu0 0.0
    %456 = vmatpush1.msra.mxu0 0.0
    %457 = vmatprep.subr.mxu0 0.0
    %458 = vmatpush1.msra.mxu0 0.0
    %459 = vmatprep.subr.mxu0 0.0
    %460 = vmatpush1.msra.mxu0 0.0
    %461 = vmatprep.subr.mxu0 0.0
    %462 = vmatpush1.msra.mxu0 0.0
    %463 = vmatprep.subr.mxu0 0.0
    %464 = vmatpush1.msra.mxu0 0.0
    %465 = vmatprep.subr.mxu0 0.0
    %466 = vmatpush1.msra.mxu0 0.0
    %467 = vmatprep.subr.mxu0 0.0
    %468 = vmatpush1.msra.mxu0 0.0
    %469 = vmatprep.subr.mxu0 0.0
    %470 = vmatpush1.msra.mxu0 0.0
    %471 = vmatprep.subr.mxu0 0.0
    %472 = vmatpush1.msra.mxu0 0.0
    %473 = vmatprep.subr.mxu0 0.0
    %474 = vmatpush1.msra.mxu0 0.0
    %475 = vmatprep.subr.mxu0 0.0
    %476 = vmatpush1.msra.mxu0 0.0
    %477 = vmatprep.subr.mxu0 0.0
    %478 = vmatpush1.msra.mxu0 0.0
    %479 = vmatprep.subr.mxu0 0.0
    %480 = vmatpush1.msra.mxu0 0.0
    %481 = vmatprep.subr.mxu0 0.0
    %482 = vmatpush1.msra.mxu0 0.0
    %483 = vmatprep.subr.mxu0 0.0
    %484 = vmatpush1.msra.mxu0 0.0
    %485 = vmatprep.subr.mxu0 0.0
    %486 = vmatpush1.msra.mxu0 0.0
    %487 = vmatprep.subr.mxu0 0.0
    %488 = vmatpush1.msra.mxu0 0.0
    %489 = vmatprep.subr.mxu0 0.0
    %490 = vmatpush1.msra.mxu0 0.0
    %491 = vmatprep.subr.mxu0 0.0
    %492 = vmatpush1.msra.mxu0 0.0
    %493 = vmatprep.subr.mxu0 0.0
    %494 = vmatpush1.msra.mxu0 0.0
    %495 = vmatprep.subr.mxu0 0.0
    %496 = vmatpush1.msra.mxu0 0.0
    %497 = vmatprep.subr.mxu0 0.0
    %498 = vmatpush1.msra.mxu0 0.0
    %499 = vmatprep.subr.mxu0 0.0
    %500 = vmatpush1.msra.mxu0 0.0
    %501 = vmatprep.subr.mxu0 0.0
    %502 = vmatpush1.msra.mxu0 0.0
    %503 = vmatprep.mubr.f32.mxu0 0.0
    %504 = vmatmul.mubr.f32.gmra.mrb[0].mxu0 %v437
    %v505 = vpop.f32.mrb[0].mxu0
    %v506 = vadd.f32 0.0, %v505
    %v507 = vpop.f32.mrb[0].mxu0
    %508 = vdwg.mxu0
    %v510 = vrot.slane %v506, 4
    %v512 = vadd.f32 %v209, %v510
    %v513 = vxor.u32 %v512, 2147483648
    %v514 = vmul.f32 %v513, 1.442695
    %v515 = vpow.pop %v514
    %v516 = vadd.f32 %v515, 1.0
    %v517 = vrcp.pop %v516
    %v518 = vmul.f32 1.0, %v517
    %v519 = vtanh.pop %v512
    %v521 = vrot.slane %v426, 6
    %v523 = vmul.f32 %v518, %v521
    %525 = vrot.lane.b32.xlu0 %v519, 64
    %v526 = vpop.permute.xlu0 %525
    %v528 = vmul.f32 %v518, %v526
    %530 = vrot.lane.b32.xlu0 %v528, 32
    %v531 = vpop.permute.xlu0 %530
    %v533 = vadd.f32 %v523, %v531
    %v534 = vtanh.pop %v533
    %536 = vrot.lane.b32.xlu0 %v534, 64
    %v537 = vpop.permute.xlu0 %536
    %v539 = vmul.f32 %v518, %v537
    %v541 = vrot.slane %v539, 4
    %542 = vrot.lane.b32.xlu0 %v541, 32
    %v543 = vpop.permute.xlu0 %542
    %v544 = vsel %vm228, %v543, 0
    %546 = vmatprep.subr.mxu0 0.0
    %547 = vmatpush1.msra.mxu0 %v217
    %548 = vmatprep.subr.mxu0 0.0
    %549 = vmatpush1.msra.mxu0 %v219
    %550 = vmatprep.subr.mxu0 0.0
    %551 = vmatpush1.msra.mxu0 %v221
    %552 = vmatprep.subr.mxu0 0.0
    %553 = vmatpush1.msra.mxu0 %v223
    %554 = vmatprep.subr.mxu0 0.0
    %555 = vmatpush1.msra.mxu0 0.0
    %556 = vmatprep.subr.mxu0 0.0
    %557 = vmatpush1.msra.mxu0 0.0
    %558 = vmatprep.subr.mxu0 0.0
    %559 = vmatpush1.msra.mxu0 0.0
    %560 = vmatprep.subr.mxu0 0.0
    %561 = vmatpush1.msra.mxu0 0.0
    %562 = vmatprep.subr.mxu0 0.0
    %563 = vmatpush1.msra.mxu0 0.0
    %564 = vmatprep.subr.mxu0 0.0
    %565 = vmatpush1.msra.mxu0 0.0
    %566 = vmatprep.subr.mxu0 0.0
    %567 = vmatpush1.msra.mxu0 0.0
    %568 = vmatprep.subr.mxu0 0.0
    %569 = vmatpush1.msra.mxu0 0.0
    %570 = vmatprep.subr.mxu0 0.0
    %571 = vmatpush1.msra.mxu0 0.0
    %572 = vmatprep.subr.mxu0 0.0
    %573 = vmatpush1.msra.mxu0 0.0
    %574 = vmatprep.subr.mxu0 0.0
    %575 = vmatpush1.msra.mxu0 0.0
    %576 = vmatprep.subr.mxu0 0.0
    %577 = vmatpush1.msra.mxu0 0.0
    %578 = vmatprep.subr.mxu0 0.0
    %579 = vmatpush1.msra.mxu0 0.0
    %580 = vmatprep.subr.mxu0 0.0
    %581 = vmatpush1.msra.mxu0 0.0
    %582 = vmatprep.subr.mxu0 0.0
    %583 = vmatpush1.msra.mxu0 0.0
    %584 = vmatprep.subr.mxu0 0.0
    %585 = vmatpush1.msra.mxu0 0.0
    %586 = vmatprep.subr.mxu0 0.0
    %587 = vmatpush1.msra.mxu0 0.0
    %588 = vmatprep.subr.mxu0 0.0
    %589 = vmatpush1.msra.mxu0 0.0
    %590 = vmatprep.subr.mxu0 0.0
    %591 = vmatpush1.msra.mxu0 0.0
    %592 = vmatprep.subr.mxu0 0.0
    %593 = vmatpush1.msra.mxu0 0.0
    %594 = vmatprep.subr.mxu0 0.0
    %595 = vmatpush1.msra.mxu0 0.0
    %596 = vmatprep.subr.mxu0 0.0
    %597 = vmatpush1.msra.mxu0 0.0
    %598 = vmatprep.subr.mxu0 0.0
    %599 = vmatpush1.msra.mxu0 0.0
    %600 = vmatprep.subr.mxu0 0.0
    %601 = vmatpush1.msra.mxu0 0.0
    %602 = vmatprep.subr.mxu0 0.0
    %603 = vmatpush1.msra.mxu0 0.0
    %604 = vmatprep.subr.mxu0 0.0
    %605 = vmatpush1.msra.mxu0 0.0
    %606 = vmatprep.subr.mxu0 0.0
    %607 = vmatpush1.msra.mxu0 0.0
    %608 = vmatprep.subr.mxu0 0.0
    %609 = vmatpush1.msra.mxu0 0.0
    %610 = vmatprep.mubr.f32.mxu0 0.0
    %611 = vmatmul.mubr.f32.gmra.mrb[0].mxu0 %v544
    %v612 = vpop.f32.mrb[0].mxu0
    %v613 = vadd.f32 0.0, %v612
    %v614 = vpop.f32.mrb[0].mxu0
    %615 = vdwg.mxu0
    %v617 = vrot.slane %v613, 2
    %v619 = vadd.f32 %v209, %v617
    %v620 = vxor.u32 %v619, 2147483648
    %v621 = vmul.f32 %v620, 1.442695
    %v622 = vpow.pop %v621
    %v623 = vadd.f32 %v622, 1.0
    %v624 = vrcp.pop %v623
    %v625 = vmul.f32 1.0, %v624
    %v626 = vtanh.pop %v619
    %v628 = vrot.slane %v533, 6
    %v630 = vmul.f32 %v625, %v628
    %632 = vrot.lane.b32.xlu0 %v626, 64
    %v633 = vpop.permute.xlu0 %632
    %v635 = vmul.f32 %v625, %v633
    %637 = vrot.lane.b32.xlu0 %v635, 32
    %v638 = vpop.permute.xlu0 %637
    %v640 = vadd.f32 %v630, %v638
    %v641 = vtanh.pop %v640
    %643 = vrot.lane.b32.xlu0 %v641, 64
    %v644 = vpop.permute.xlu0 %643
    %v646 = vmul.f32 %v625, %v644
    %v648 = vrot.slane %v646, 6
    %649 = vrot.lane.b32.xlu0 %v648, 32
    %v650 = vpop.permute.xlu0 %649
    %v651 = vsel %vm228, %v650, 0
    %653 = vmatprep.subr.mxu0 0.0
    %654 = vmatpush1.msra.mxu0 %v217
    %655 = vmatprep.subr.mxu0 0.0
    %656 = vmatpush1.msra.mxu0 %v219
    %657 = vmatprep.subr.mxu0 0.0
    %658 = vmatpush1.msra.mxu0 %v221
    %659 = vmatprep.subr.mxu0 0.0
    %660 = vmatpush1.msra.mxu0 %v223
    %661 = vmatprep.subr.mxu0 0.0
    %662 = vmatpush1.msra.mxu0 0.0
    %663 = vmatprep.subr.mxu0 0.0
    %664 = vmatpush1.msra.mxu0 0.0
    %665 = vmatprep.subr.mxu0 0.0
    %666 = vmatpush1.msra.mxu0 0.0
    %667 = vmatprep.subr.mxu0 0.0
    %668 = vmatpush1.msra.mxu0 0.0
    %669 = vmatprep.subr.mxu0 0.0
    %670 = vmatpush1.msra.mxu0 0.0
    %671 = vmatprep.subr.mxu0 0.0
    %672 = vmatpush1.msra.mxu0 0.0
    %673 = vmatprep.subr.mxu0 0.0
    %674 = vmatpush1.msra.mxu0 0.0
    %675 = vmatprep.subr.mxu0 0.0
    %676 = vmatpush1.msra.mxu0 0.0
    %677 = vmatprep.subr.mxu0 0.0
    %678 = vmatpush1.msra.mxu0 0.0
    %679 = vmatprep.subr.mxu0 0.0
    %680 = vmatpush1.msra.mxu0 0.0
    %681 = vmatprep.subr.mxu0 0.0
    %682 = vmatpush1.msra.mxu0 0.0
    %683 = vmatprep.subr.mxu0 0.0
    %684 = vmatpush1.msra.mxu0 0.0
    %685 = vmatprep.subr.mxu0 0.0
    %686 = vmatpush1.msra.mxu0 0.0
    %687 = vmatprep.subr.mxu0 0.0
    %688 = vmatpush1.msra.mxu0 0.0
    %689 = vmatprep.subr.mxu0 0.0
    %690 = vmatpush1.msra.mxu0 0.0
    %691 = vmatprep.subr.mxu0 0.0
    %692 = vmatpush1.msra.mxu0 0.0
    %693 = vmatprep.subr.mxu0 0.0
    %694 = vmatpush1.msra.mxu0 0.0
    %695 = vmatprep.subr.mxu0 0.0
    %696 = vmatpush1.msra.mxu0 0.0
    %697 = vmatprep.subr.mxu0 0.0
    %698 = vmatpush1.msra.mxu0 0.0
    %699 = vmatprep.subr.mxu0 0.0
    %700 = vmatpush1.msra.mxu0 0.0
    %701 = vmatprep.subr.mxu0 0.0
    %702 = vmatpush1.msra.mxu0 0.0
    %703 = vmatprep.subr.mxu0 0.0
    %704 = vmatpush1.msra.mxu0 0.0
    %705 = vmatprep.subr.mxu0 0.0
    %706 = vmatpush1.msra.mxu0 0.0
    %707 = vmatprep.subr.mxu0 0.0
    %708 = vmatpush1.msra.mxu0 0.0
    %709 = vmatprep.subr.mxu0 0.0
    %710 = vmatpush1.msra.mxu0 0.0
    %711 = vmatprep.subr.mxu0 0.0
    %712 = vmatpush1.msra.mxu0 0.0
    %713 = vmatprep.subr.mxu0 0.0
    %714 = vmatpush1.msra.mxu0 0.0
    %715 = vmatprep.subr.mxu0 0.0
    %716 = vmatpush1.msra.mxu0 0.0
    %717 = vmatprep.mubr.f32.mxu0 0.0
    %718 = vmatmul.mubr.f32.gmra.mrb[0].mxu0 %v651
    %v719 = vpop.f32.mrb[0].mxu0
    %v720 = vadd.f32 0.0, %v719
    %v721 = vpop.f32.mrb[0].mxu0
    %722 = vdwg.mxu0
    %v723 = vadd.f32 %v210, %v720
    %v724 = vxor.u32 %v723, 2147483648
    %v725 = vmul.f32 %v724, 1.442695
    %v726 = vpow.pop %v725
    %v727 = vadd.f32 %v726, 1.0
    %v728 = vrcp.pop %v727
    %v729 = vmul.f32 1.0, %v728
    %v730 = vtanh.pop %v723
    %v732 = vrot.slane %v640, 6
    %v734 = vmul.f32 %v729, %v732
    %736 = vrot.lane.b32.xlu0 %v730, 64
    %v737 = vpop.permute.xlu0 %736
    %v739 = vmul.f32 %v729, %v737
    %741 = vrot.lane.b32.xlu0 %v739, 32
    %v742 = vpop.permute.xlu0 %741
    %v744 = vadd.f32 %v734, %v742
    %v745 = vtanh.pop %v744
    %747 = vrot.lane.b32.xlu0 %v745, 64
    %v748 = vpop.permute.xlu0 %747
    %v750 = vmul.f32 %v729, %v748
    %752 = vrot.lane.b32.xlu0 %v750, 32
    %v753 = vpop.permute.xlu0 %752
    %v754 = vsel %vm228, %v753, 0
    %756 = vmatprep.subr.mxu0 0.0
    %757 = vmatpush1.msra.mxu0 %v217
    %758 = vmatprep.subr.mxu0 0.0
    %759 = vmatpush1.msra.mxu0 %v219
    %760 = vmatprep.subr.mxu0 0.0
    %761 = vmatpush1.msra.mxu0 %v221
    %762 = vmatprep.subr.mxu0 0.0
    %763 = vmatpush1.msra.mxu0 %v223
    %764 = vmatprep.subr.mxu0 0.0
    %765 = vmatpush1.msra.mxu0 0.0
    %766 = vmatprep.subr.mxu0 0.0
    %767 = vmatpush1.msra.mxu0 0.0
    %768 = vmatprep.subr.mxu0 0.0
    %769 = vmatpush1.msra.mxu0 0.0
    %770 = vmatprep.subr.mxu0 0.0
    %771 = vmatpush1.msra.mxu0 0.0
    %772 = vmatprep.subr.mxu0 0.0
    %773 = vmatpush1.msra.mxu0 0.0
    %774 = vmatprep.subr.mxu0 0.0
    %775 = vmatpush1.msra.mxu0 0.0
    %776 = vmatprep.subr.mxu0 0.0
    %777 = vmatpush1.msra.mxu0 0.0
    %778 = vmatprep.subr.mxu0 0.0
    %779 = vmatpush1.msra.mxu0 0.0
    %780 = vmatprep.subr.mxu0 0.0
    %781 = vmatpush1.msra.mxu0 0.0
    %782 = vmatprep.subr.mxu0 0.0
    %783 = vmatpush1.msra.mxu0 0.0
    %784 = vmatprep.subr.mxu0 0.0
    %785 = vmatpush1.msra.mxu0 0.0
    %786 = vmatprep.subr.mxu0 0.0
    %787 = vmatpush1.msra.mxu0 0.0
    %788 = vmatprep.subr.mxu0 0.0
    %789 = vmatpush1.msra.mxu0 0.0
    %790 = vmatprep.subr.mxu0 0.0
    %791 = vmatpush1.msra.mxu0 0.0
    %792 = vmatprep.subr.mxu0 0.0
    %793 = vmatpush1.msra.mxu0 0.0
    %794 = vmatprep.subr.mxu0 0.0
    %795 = vmatpush1.msra.mxu0 0.0
    %796 = vmatprep.subr.mxu0 0.0
    %797 = vmatpush1.msra.mxu0 0.0
    %798 = vmatprep.subr.mxu0 0.0
    %799 = vmatpush1.msra.mxu0 0.0
    %800 = vmatprep.subr.mxu0 0.0
    %801 = vmatpush1.msra.mxu0 0.0
    %802 = vmatprep.subr.mxu0 0.0
    %803 = vmatpush1.msra.mxu0 0.0
    %804 = vmatprep.subr.mxu0 0.0
    %805 = vmatpush1.msra.mxu0 0.0
    %806 = vmatprep.subr.mxu0 0.0
    %807 = vmatpush1.msra.mxu0 0.0
    %808 = vmatprep.subr.mxu0 0.0
    %809 = vmatpush1.msra.mxu0 0.0
    %810 = vmatprep.subr.mxu0 0.0
    %811 = vmatpush1.msra.mxu0 0.0
    %812 = vmatprep.subr.mxu0 0.0
    %813 = vmatpush1.msra.mxu0 0.0
    %814 = vmatprep.subr.mxu0 0.0
    %815 = vmatpush1.msra.mxu0 0.0
    %816 = vmatprep.subr.mxu0 0.0
    %817 = vmatpush1.msra.mxu0 0.0
    %818 = vmatprep.subr.mxu0 0.0
    %819 = vmatpush1.msra.mxu0 0.0
    %820 = vmatprep.mubr.f32.mxu0 0.0
    %821 = vmatmul.mubr.f32.gmra.mrb[0].mxu0 %v754
    %v822 = vpop.f32.mrb[0].mxu0
    %v823 = vadd.f32 0.0, %v822
    %v824 = vpop.f32.mrb[0].mxu0
    %825 = vdwg.mxu0
    %v827 = vrot.slane %v823, 6
    %v829 = vadd.f32 %v210, %v827
    %v830 = vxor.u32 %v829, 2147483648
    %v831 = vmul.f32 %v830, 1.442695
    %v832 = vpow.pop %v831
    %v833 = vadd.f32 %v832, 1.0
    %v834 = vrcp.pop %v833
    %v835 = vmul.f32 1.0, %v834
    %v836 = vtanh.pop %v829
    %v838 = vrot.slane %v744, 6
    %v840 = vmul.f32 %v835, %v838
    %842 = vrot.lane.b32.xlu0 %v836, 64
    %v843 = vpop.permute.xlu0 %842
    %v845 = vmul.f32 %v835, %v843
    %847 = vrot.lane.b32.xlu0 %v845, 32
    %v848 = vpop.permute.xlu0 %847
    %v850 = vadd.f32 %v840, %v848
    %v851 = vtanh.pop %v850
    %853 = vrot.lane.b32.xlu0 %v851, 64
    %v854 = vpop.permute.xlu0 %853
    %v856 = vmul.f32 %v835, %v854
    %v858 = vrot.slane %v856, 2
    %859 = vrot.lane.b32.xlu0 %v858, 32
    %v860 = vpop.permute.xlu0 %859
    %v861 = vsel %vm228, %v860, 0
    %863 = vmatprep.subr.mxu0 0.0
    %864 = vmatpush1.msra.mxu0 %v217
    %865 = vmatprep.subr.mxu0 0.0
    %866 = vmatpush1.msra.mxu0 %v219
    %867 = vmatprep.subr.mxu0 0.0
    %868 = vmatpush1.msra.mxu0 %v221
    %869 = vmatprep.subr.mxu0 0.0
    %870 = vmatpush1.msra.mxu0 %v223
    %871 = vmatprep.subr.mxu0 0.0
    %872 = vmatpush1.msra.mxu0 0.0
    %873 = vmatprep.subr.mxu0 0.0
    %874 = vmatpush1.msra.mxu0 0.0
    %875 = vmatprep.subr.mxu0 0.0
    %876 = vmatpush1.msra.mxu0 0.0
    %877 = vmatprep.subr.mxu0 0.0
    %878 = vmatpush1.msra.mxu0 0.0
    %879 = vmatprep.subr.mxu0 0.0
    %880 = vmatpush1.msra.mxu0 0.0
    %881 = vmatprep.subr.mxu0 0.0
    %882 = vmatpush1.msra.mxu0 0.0
    %883 = vmatprep.subr.mxu0 0.0
    %884 = vmatpush1.msra.mxu0 0.0
    %885 = vmatprep.subr.mxu0 0.0
    %886 = vmatpush1.msra.mxu0 0.0
    %887 = vmatprep.subr.mxu0 0.0
    %888 = vmatpush1.msra.mxu0 0.0
    %889 = vmatprep.subr.mxu0 0.0
    %890 = vmatpush1.msra.mxu0 0.0
    %891 = vmatprep.subr.mxu0 0.0
    %892 = vmatpush1.msra.mxu0 0.0
    %893 = vmatprep.subr.mxu0 0.0
    %894 = vmatpush1.msra.mxu0 0.0
    %895 = vmatprep.subr.mxu0 0.0
    %896 = vmatpush1.msra.mxu0 0.0
    %897 = vmatprep.subr.mxu0 0.0
    %898 = vmatpush1.msra.mxu0 0.0
    %899 = vmatprep.subr.mxu0 0.0
    %900 = vmatpush1.msra.mxu0 0.0
    %901 = vmatprep.subr.mxu0 0.0
    %902 = vmatpush1.msra.mxu0 0.0
    %903 = vmatprep.subr.mxu0 0.0
    %904 = vmatpush1.msra.mxu0 0.0
    %905 = vmatprep.subr.mxu0 0.0
    %906 = vmatpush1.msra.mxu0 0.0
    %907 = vmatprep.subr.mxu0 0.0
    %908 = vmatpush1.msra.mxu0 0.0
    %909 = vmatprep.subr.mxu0 0.0
    %910 = vmatpush1.msra.mxu0 0.0
    %911 = vmatprep.subr.mxu0 0.0
    %912 = vmatpush1.msra.mxu0 0.0
    %913 = vmatprep.subr.mxu0 0.0
    %914 = vmatpush1.msra.mxu0 0.0
    %915 = vmatprep.subr.mxu0 0.0
    %916 = vmatpush1.msra.mxu0 0.0
    %917 = vmatprep.subr.mxu0 0.0
    %918 = vmatpush1.msra.mxu0 0.0
    %919 = vmatprep.subr.mxu0 0.0
    %920 = vmatpush1.msra.mxu0 0.0
    %921 = vmatprep.subr.mxu0 0.0
    %922 = vmatpush1.msra.mxu0 0.0
    %923 = vmatprep.subr.mxu0 0.0
    %924 = vmatpush1.msra.mxu0 0.0
    %925 = vmatprep.subr.mxu0 0.0
    %926 = vmatpush1.msra.mxu0 0.0
    %927 = vmatprep.mubr.f32.mxu0 0.0
    %928 = vmatmul.mubr.f32.gmra.mrb[0].mxu0 %v861
    %v929 = vpop.f32.mrb[0].mxu0
    %v930 = vadd.f32 0.0, %v929
    %v931 = vpop.f32.mrb[0].mxu0
    %932 = vdwg.mxu0
    %v934 = vrot.slane %v930, 4
    %v936 = vadd.f32 %v210, %v934
    %v937 = vxor.u32 %v936, 2147483648
    %v938 = vmul.f32 %v937, 1.442695
    %v939 = vpow.pop %v938
    %v940 = vadd.f32 %v939, 1.0
    %v941 = vrcp.pop %v940
    %v942 = vmul.f32 1.0, %v941
    %v943 = vtanh.pop %v936
    %v945 = vrot.slane %v850, 6
    %v947 = vmul.f32 %v942, %v945
    %949 = vrot.lane.b32.xlu0 %v943, 64
    %v950 = vpop.permute.xlu0 %949
    %v952 = vmul.f32 %v942, %v950
    %954 = vrot.lane.b32.xlu0 %v952, 32
    %v955 = vpop.permute.xlu0 %954
    %v957 = vadd.f32 %v947, %v955
    %v958 = vtanh.pop %v957
    %960 = vrot.lane.b32.xlu0 %v958, 64
    %v961 = vpop.permute.xlu0 %960
    %v963 = vmul.f32 %v942, %v961
    %v965 = vrot.slane %v963, 4
    %966 = vrot.lane.b32.xlu0 %v965, 32
    %v967 = vpop.permute.xlu0 %966
    %v968 = vsel %vm228, %v967, 0
    %970 = vmatprep.subr.mxu0 0.0
    %971 = vmatpush1.msra.mxu0 %v217
    %972 = vmatprep.subr.mxu0 0.0
    %973 = vmatpush1.msra.mxu0 %v219
    %974 = vmatprep.subr.mxu0 0.0
    %975 = vmatpush1.msra.mxu0 %v221
    %976 = vmatprep.subr.mxu0 0.0
    %977 = vmatpush1.msra.mxu0 %v223
    %978 = vmatprep.subr.mxu0 0.0
    %979 = vmatpush1.msra.mxu0 0.0
    %980 = vmatprep.subr.mxu0 0.0
    %981 = vmatpush1.msra.mxu0 0.0
    %982 = vmatprep.subr.mxu0 0.0
    %983 = vmatpush1.msra.mxu0 0.0
    %984 = vmatprep.subr.mxu0 0.0
    %985 = vmatpush1.msra.mxu0 0.0
    %986 = vmatprep.subr.mxu0 0.0
    %987 = vmatpush1.msra.mxu0 0.0
    %988 = vmatprep.subr.mxu0 0.0
    %989 = vmatpush1.msra.mxu0 0.0
    %990 = vmatprep.subr.mxu0 0.0
    %991 = vmatpush1.msra.mxu0 0.0
    %992 = vmatprep.subr.mxu0 0.0
    %993 = vmatpush1.msra.mxu0 0.0
    %994 = vmatprep.subr.mxu0 0.0
    %995 = vmatpush1.msra.mxu0 0.0
    %996 = vmatprep.subr.mxu0 0.0
    %997 = vmatpush1.msra.mxu0 0.0
    %998 = vmatprep.subr.mxu0 0.0
    %999 = vmatpush1.msra.mxu0 0.0
    %1000 = vmatprep.subr.mxu0 0.0
    %1001 = vmatpush1.msra.mxu0 0.0
    %1002 = vmatprep.subr.mxu0 0.0
    %1003 = vmatpush1.msra.mxu0 0.0
    %1004 = vmatprep.subr.mxu0 0.0
    %1005 = vmatpush1.msra.mxu0 0.0
    %1006 = vmatprep.subr.mxu0 0.0
    %1007 = vmatpush1.msra.mxu0 0.0
    %1008 = vmatprep.subr.mxu0 0.0
    %1009 = vmatpush1.msra.mxu0 0.0
    %1010 = vmatprep.subr.mxu0 0.0
    %1011 = vmatpush1.msra.mxu0 0.0
    %1012 = vmatprep.subr.mxu0 0.0
    %1013 = vmatpush1.msra.mxu0 0.0
    %1014 = vmatprep.subr.mxu0 0.0
    %1015 = vmatpush1.msra.mxu0 0.0
    %1016 = vmatprep.subr.mxu0 0.0
    %1017 = vmatpush1.msra.mxu0 0.0
    %1018 = vmatprep.subr.mxu0 0.0
    %1019 = vmatpush1.msra.mxu0 0.0
    %1020 = vmatprep.subr.mxu0 0.0
    %1021 = vmatpush1.msra.mxu0 0.0
    %1022 = vmatprep.subr.mxu0 0.0
    %1023 = vmatpush1.msra.mxu0 0.0
    %1024 = vmatprep.subr.mxu0 0.0
    %1025 = vmatpush1.msra.mxu0 0.0
    %1026 = vmatprep.subr.mxu0 0.0
    %1027 = vmatpush1.msra.mxu0 0.0
    %1028 = vmatprep.subr.mxu0 0.0
    %1029 = vmatpush1.msra.mxu0 0.0
    %1030 = vmatprep.subr.mxu0 0.0
    %1031 = vmatpush1.msra.mxu0 0.0
    %1032 = vmatprep.subr.mxu0 0.0
    %1033 = vmatpush1.msra.mxu0 0.0
    %1034 = vmatprep.mubr.f32.mxu0 0.0
    %1035 = vmatmul.mubr.f32.gmra.mrb[0].mxu0 %v968
    %v1036 = vpop.f32.mrb[0].mxu0
    %v1037 = vadd.f32 0.0, %v1036
    %v1038 = vpop.f32.mrb[0].mxu0
    %1039 = vdwg.mxu0
    %v1041 = vrot.slane %v1037, 2
    %v1043 = vadd.f32 %v210, %v1041
    %v1044 = vxor.u32 %v1043, 2147483648
    %v1045 = vmul.f32 %v1044, 1.442695
    %v1046 = vpow.pop %v1045
    %v1047 = vadd.f32 %v1046, 1.0
    %v1048 = vrcp.pop %v1047
    %v1049 = vmul.f32 1.0, %v1048
    %v1050 = vtanh.pop %v1043
    %v1052 = vrot.slane %v957, 6
    %v1054 = vmul.f32 %v1049, %v1052
    %1056 = vrot.lane.b32.xlu0 %v1050, 64
    %v1057 = vpop.permute.xlu0 %1056
    %v1059 = vmul.f32 %v1049, %v1057
    %1061 = vrot.lane.b32.xlu0 %v1059, 32
    %v1062 = vpop.permute.xlu0 %1061
    %v1064 = vadd.f32 %v1054, %v1062
    %v1065 = vtanh.pop %v1064
    %1067 = vrot.lane.b32.xlu0 %v1065, 64
    %v1068 = vpop.permute.xlu0 %1067
    %v1070 = vmul.f32 %v1049, %v1068
    %v1071 = vld [vmem:[%s3] sm:$0xff]
    %v1072 = vld [vmem:[%s3 + $0x8] sm:$0xff]
    %v1073 = vld [vmem:[%s3 + $0x10] sm:$0xff]
    %v1074 = vld [vmem:[%s3 + $0x18] sm:$0xff]
    %v1075 = vld [vmem:[%s3 + $0x20] sm:$0x3]
    %v1077 = vrot.slane %v1070, 6
    %1078 = vrot.lane.b32.xlu0 %v1077, 32
    %v1079 = vpop.permute.xlu0 %1078
    %v1080 = vsel %vm228, %v1079, 0
    %1082 = vmatprep.subr.mxu0 0.0
    %1083 = vmatpush1.msra.mxu0 %v1071
    %1084 = vmatprep.subr.mxu0 0.0
    %1085 = vmatpush1.msra.mxu0 %v1072
    %1086 = vmatprep.subr.mxu0 0.0
    %1087 = vmatpush1.msra.mxu0 %v1073
    %1088 = vmatprep.subr.mxu0 0.0
    %1089 = vmatpush1.msra.mxu0 %v1074
    %1090 = vmatprep.subr.mxu0 0.0
    %1091 = vmatpush1.msra.mxu0 0.0
    %1092 = vmatprep.subr.mxu0 0.0
    %1093 = vmatpush1.msra.mxu0 0.0
    %1094 = vmatprep.subr.mxu0 0.0
    %1095 = vmatpush1.msra.mxu0 0.0
    %1096 = vmatprep.subr.mxu0 0.0
    %1097 = vmatpush1.msra.mxu0 0.0
    %1098 = vmatprep.subr.mxu0 0.0
    %1099 = vmatpush1.msra.mxu0 0.0
    %1100 = vmatprep.subr.mxu0 0.0
    %1101 = vmatpush1.msra.mxu0 0.0
    %1102 = vmatprep.subr.mxu0 0.0
    %1103 = vmatpush1.msra.mxu0 0.0
    %1104 = vmatprep.subr.mxu0 0.0
    %1105 = vmatpush1.msra.mxu0 0.0
    %1106 = vmatprep.subr.mxu0 0.0
    %1107 = vmatpush1.msra.mxu0 0.0
    %1108 = vmatprep.subr.mxu0 0.0
    %1109 = vmatpush1.msra.mxu0 0.0
    %1110 = vmatprep.subr.mxu0 0.0
    %1111 = vmatpush1.msra.mxu0 0.0
    %1112 = vmatprep.subr.mxu0 0.0
    %1113 = vmatpush1.msra.mxu0 0.0
    %1114 = vmatprep.subr.mxu0 0.0
    %1115 = vmatpush1.msra.mxu0 0.0
    %1116 = vmatprep.subr.mxu0 0.0
    %1117 = vmatpush1.msra.mxu0 0.0
    %1118 = vmatprep.subr.mxu0 0.0
    %1119 = vmatpush1.msra.mxu0 0.0
    %1120 = vmatprep.subr.mxu0 0.0
    %1121 = vmatpush1.msra.mxu0 0.0
    %1122 = vmatprep.subr.mxu0 0.0
    %1123 = vmatpush1.msra.mxu0 0.0
    %1124 = vmatprep.subr.mxu0 0.0
    %1125 = vmatpush1.msra.mxu0 0.0
    %1126 = vmatprep.subr.mxu0 0.0
    %1127 = vmatpush1.msra.mxu0 0.0
    %1128 = vmatprep.subr.mxu0 0.0
    %1129 = vmatpush1.msra.mxu0 0.0
    %1130 = vmatprep.subr.mxu0 0.0
    %1131 = vmatpush1.msra.mxu0 0.0
    %1132 = vmatprep.subr.mxu0 0.0
    %1133 = vmatpush1.msra.mxu0 0.0
    %1134 = vmatprep.subr.mxu0 0.0
    %1135 = vmatpush1.msra.mxu0 0.0
    %1136 = vmatprep.subr.mxu0 0.0
    %1137 = vmatpush1.msra.mxu0 0.0
    %1138 = vmatprep.subr.mxu0 0.0
    %1139 = vmatpush1.msra.mxu0 0.0
    %1140 = vmatprep.subr.mxu0 0.0
    %1141 = vmatpush1.msra.mxu0 0.0
    %1142 = vmatprep.subr.mxu0 0.0
    %1143 = vmatpush1.msra.mxu0 0.0
    %1144 = vmatprep.subr.mxu0 0.0
    %1145 = vmatpush1.msra.mxu0 0.0
    %1146 = vmatprep.mubr.f32.mxu0 0.0
    %1147 = vmatmul.mubr.f32.gmra.mrb[0].mxu0 %v1080
    %v1148 = vpop.f32.mrb[0].mxu0
    %v1149 = vadd.f32 0.0, %v1148
    %v1150 = vpop.f32.mrb[0].mxu0
    %1151 = vdwg.mxu0
    %vm1152 = vcmask 254976
    %v1153 = vsel %vm1152, %v1149, 0.0
    %v1154 = vrot.slane %v1153, 4
    %v1155 = vadd.f32 %v1153, %v1154
    %v1156 = vrot.slane %v1155, 2
    %v1157 = vadd.f32 %v1155, %v1156
    %v1158 = vrot.slane %v1157, 1
    %v1159 = vadd.f32 %v1157, %v1158
    %v1160 = vrcp.pop 2.0
    %v1161 = vmul.f32 %v1159, %v1160
    %v1162 = vsub.f32 %v1149, %v1161
    %v1163 = vmul.f32 %v1162, %v1162
    %v1164 = vsel %vm1152, %v1163, 0.0
    %v1165 = vrot.slane %v1164, 4
    %v1166 = vadd.f32 %v1164, %v1165
    %v1167 = vrot.slane %v1166, 2
    %v1168 = vadd.f32 %v1166, %v1167
    %v1169 = vrot.slane %v1168, 1
    %v1170 = vadd.f32 %v1168, %v1169
    %v1171 = vmul.f32 %v1170, %v1160
    %v1172 = vadd.f32 %v1171, 1e-05
    %v1173 = vrsqrt.pop %v1172
    %v1174 = vmul.f32 %v1162, %v1173
    %v1175 = vlaneseq
    %v1176 = vshrl.u32 %v1175, 7
    %v1177 = vsub.s32 0, %v1176
    %v1178 = vrot.slane %v1075, %v1177
    %v1179 = vmul.f32 %v1174, %v1178
    %v1180 = vlaneseq
    %v1181 = vshrl.u32 %v1180, 7
    %v1182 = vsub.s32 1, %v1181
    %v1183 = vrot.slane %v1075, %v1182
    %v1184 = vadd.f32 %v1179, %v1183
    %v1185 = vmax.f32 %v1184, 0.0
    %v1186 = vld [vmem:[%s4] sm:$0xff]
    %v1187 = vld [vmem:[%s4 + $0x8] sm:$0xff]
    %v1188 = vld [vmem:[%s4 + $0x10] sm:$0xff]
    %v1189 = vld [vmem:[%s4 + $0x18] sm:$0xff]
    %v1190 = vld [vmem:[%s4 + $0x20] sm:$0x3]
    %v1192 = vsel %vm228, %v1185, 0
    %1194 = vmatprep.subr.mxu0 0.0
    %1195 = vmatpush1.msra.mxu0 %v1186
    %1196 = vmatprep.subr.mxu0 0.0
    %1197 = vmatpush1.msra.mxu0 %v1187
    %1198 = vmatprep.subr.mxu0 0.0
    %1199 = vmatpush1.msra.mxu0 %v1188
    %1200 = vmatprep.subr.mxu0 0.0
    %1201 = vmatpush1.msra.mxu0 %v1189
    %1202 = vmatprep.subr.mxu0 0.0
    %1203 = vmatpush1.msra.mxu0 0.0
    %1204 = vmatprep.subr.mxu0 0.0
    %1205 = vmatpush1.msra.mxu0 0.0
    %1206 = vmatprep.subr.mxu0 0.0
    %1207 = vmatpush1.msra.mxu0 0.0
    %1208 = vmatprep.subr.mxu0 0.0
    %1209 = vmatpush1.msra.mxu0 0.0
    %1210 = vmatprep.subr.mxu0 0.0
    %1211 = vmatpush1.msra.mxu0 0.0
    %1212 = vmatprep.subr.mxu0 0.0
    %1213 = vmatpush1.msra.mxu0 0.0
    %1214 = vmatprep.subr.mxu0 0.0
    %1215 = vmatpush1.msra.mxu0 0.0
    %1216 = vmatprep.subr.mxu0 0.0
    %1217 = vmatpush1.msra.mxu0 0.0
    %1218 = vmatprep.subr.mxu0 0.0
    %1219 = vmatpush1.msra.mxu0 0.0
    %1220 = vmatprep.subr.mxu0 0.0
    %1221 = vmatpush1.msra.mxu0 0.0
    %1222 = vmatprep.subr.mxu0 0.0
    %1223 = vmatpush1.msra.mxu0 0.0
    %1224 = vmatprep.subr.mxu0 0.0
    %1225 = vmatpush1.msra.mxu0 0.0
    %1226 = vmatprep.subr.mxu0 0.0
    %1227 = vmatpush1.msra.mxu0 0.0
    %1228 = vmatprep.subr.mxu0 0.0
    %1229 = vmatpush1.msra.mxu0 0.0
    %1230 = vmatprep.subr.mxu0 0.0
    %1231 = vmatpush1.msra.mxu0 0.0
    %1232 = vmatprep.subr.mxu0 0.0
    %1233 = vmatpush1.msra.mxu0 0.0
    %1234 = vmatprep.subr.mxu0 0.0
    %1235 = vmatpush1.msra.mxu0 0.0
    %1236 = vmatprep.subr.mxu0 0.0
    %1237 = vmatpush1.msra.mxu0 0.0
    %1238 = vmatprep.subr.mxu0 0.0
    %1239 = vmatpush1.msra.mxu0 0.0
    %1240 = vmatprep.subr.mxu0 0.0
    %1241 = vmatpush1.msra.mxu0 0.0
    %1242 = vmatprep.subr.mxu0 0.0
    %1243 = vmatpush1.msra.mxu0 0.0
    %1244 = vmatprep.subr.mxu0 0.0
    %1245 = vmatpush1.msra.mxu0 0.0
    %1246 = vmatprep.subr.mxu0 0.0
    %1247 = vmatpush1.msra.mxu0 0.0
    %1248 = vmatprep.subr.mxu0 0.0
    %1249 = vmatpush1.msra.mxu0 0.0
    %1250 = vmatprep.subr.mxu0 0.0
    %1251 = vmatpush1.msra.mxu0 0.0
    %1252 = vmatprep.subr.mxu0 0.0
    %1253 = vmatpush1.msra.mxu0 0.0
    %1254 = vmatprep.subr.mxu0 0.0
    %1255 = vmatpush1.msra.mxu0 0.0
    %1256 = vmatprep.subr.mxu0 0.0
    %1257 = vmatpush1.msra.mxu0 0.0
    %1258 = vmatprep.mubr.f32.mxu0 0.0
    %1259 = vmatmul.mubr.f32.gmra.mrb[0].mxu0 %v1192
    %v1260 = vpop.f32.mrb[0].mxu0
    %v1261 = vadd.f32 0.0, %v1260
    %v1262 = vpop.f32.mrb[0].mxu0
    %1263 = vdwg.mxu0
    %v1264 = vsel %vm1152, %v1261, 0.0
    %v1265 = vrot.slane %v1264, 4
    %v1266 = vadd.f32 %v1264, %v1265
    %v1267 = vrot.slane %v1266, 2
    %v1268 = vadd.f32 %v1266, %v1267
    %v1269 = vrot.slane %v1268, 1
    %v1270 = vadd.f32 %v1268, %v1269
    %v1271 = vmul.f32 %v1270, %v1160
    %v1272 = vsub.f32 %v1261, %v1271
    %v1273 = vmul.f32 %v1272, %v1272
    %v1274 = vsel %vm1152, %v1273, 0.0
    %v1275 = vrot.slane %v1274, 4
    %v1276 = vadd.f32 %v1274, %v1275
    %v1277 = vrot.slane %v1276, 2
    %v1278 = vadd.f32 %v1276, %v1277
    %v1279 = vrot.slane %v1278, 1
    %v1280 = vadd.f32 %v1278, %v1279
    %v1281 = vmul.f32 %v1280, %v1160
    %v1282 = vadd.f32 %v1281, 1e-05
    %v1283 = vrsqrt.pop %v1282
    %v1284 = vmul.f32 %v1272, %v1283
    %v1285 = vlaneseq
    %v1286 = vshrl.u32 %v1285, 7
    %v1287 = vsub.s32 0, %v1286
    %v1288 = vrot.slane %v1190, %v1287
    %v1289 = vmul.f32 %v1284, %v1288
    %v1290 = vlaneseq
    %v1291 = vshrl.u32 %v1290, 7
    %v1292 = vsub.s32 1, %v1291
    %v1293 = vrot.slane %v1190, %v1292
    %v1294 = vadd.f32 %v1289, %v1293
    %v1295 = vmax.f32 %v1294, 0.0
    %v1296 = vld [vmem:[%s5] sm:$0xff]
    %v1297 = vld [vmem:[%s5 + $0x8] sm:$0xff]
    %v1298 = vld [vmem:[%s5 + $0x10] sm:$0xff]
    %v1299 = vld [vmem:[%s5 + $0x18] sm:$0xff]
    %v1300 = vld [vmem:[%s5 + $0x20] sm:$0x1]
    %v1301 = vlaneseq
    %v1302 = vshrl.u32 %v1301, 7
    %v1303 = vsub.s32 0, %v1302
    %v1304 = vrot.slane %v1300, %v1303
    %v1306 = vsel %vm228, %v1295, 0
    %1308 = vmatprep.subr.mxu0 0.0
    %1309 = vmatpush1.msra.mxu0 %v1296
    %1310 = vmatprep.subr.mxu0 0.0
    %1311 = vmatpush1.msra.mxu0 %v1297
    %1312 = vmatprep.subr.mxu0 0.0
    %1313 = vmatpush1.msra.mxu0 %v1298
    %1314 = vmatprep.subr.mxu0 0.0
    %1315 = vmatpush1.msra.mxu0 %v1299
    %1316 = vmatprep.subr.mxu0 0.0
    %1317 = vmatpush1.msra.mxu0 0.0
    %1318 = vmatprep.subr.mxu0 0.0
    %1319 = vmatpush1.msra.mxu0 0.0
    %1320 = vmatprep.subr.mxu0 0.0
    %1321 = vmatpush1.msra.mxu0 0.0
    %1322 = vmatprep.subr.mxu0 0.0
    %1323 = vmatpush1.msra.mxu0 0.0
    %1324 = vmatprep.subr.mxu0 0.0
    %1325 = vmatpush1.msra.mxu0 0.0
    %1326 = vmatprep.subr.mxu0 0.0
    %1327 = vmatpush1.msra.mxu0 0.0
    %1328 = vmatprep.subr.mxu0 0.0
    %1329 = vmatpush1.msra.mxu0 0.0
    %1330 = vmatprep.subr.mxu0 0.0
    %1331 = vmatpush1.msra.mxu0 0.0
    %1332 = vmatprep.subr.mxu0 0.0
    %1333 = vmatpush1.msra.mxu0 0.0
    %1334 = vmatprep.subr.mxu0 0.0
    %1335 = vmatpush1.msra.mxu0 0.0
    %1336 = vmatprep.subr.mxu0 0.0
    %1337 = vmatpush1.msra.mxu0 0.0
    %1338 = vmatprep.subr.mxu0 0.0
    %1339 = vmatpush1.msra.mxu0 0.0
    %1340 = vmatprep.subr.mxu0 0.0
    %1341 = vmatpush1.msra.mxu0 0.0
    %1342 = vmatprep.subr.mxu0 0.0
    %1343 = vmatpush1.msra.mxu0 0.0
    %1344 = vmatprep.subr.mxu0 0.0
    %1345 = vmatpush1.msra.mxu0 0.0
    %1346 = vmatprep.subr.mxu0 0.0
    %1347 = vmatpush1.msra.mxu0 0.0
    %1348 = vmatprep.subr.mxu0 0.0
    %1349 = vmatpush1.msra.mxu0 0.0
    %1350 = vmatprep.subr.mxu0 0.0
    %1351 = vmatpush1.msra.mxu0 0.0
    %1352 = vmatprep.subr.mxu0 0.0
    %1353 = vmatpush1.msra.mxu0 0.0
    %1354 = vmatprep.subr.mxu0 0.0
    %1355 = vmatpush1.msra.mxu0 0.0
    %1356 = vmatprep.subr.mxu0 0.0
    %1357 = vmatpush1.msra.mxu0 0.0
    %1358 = vmatprep.subr.mxu0 0.0
    %1359 = vmatpush1.msra.mxu0 0.0
    %1360 = vmatprep.subr.mxu0 0.0
    %1361 = vmatpush1.msra.mxu0 0.0
    %1362 = vmatprep.subr.mxu0 0.0
    %1363 = vmatpush1.msra.mxu0 0.0
    %1364 = vmatprep.subr.mxu0 0.0
    %1365 = vmatpush1.msra.mxu0 0.0
    %1366 = vmatprep.subr.mxu0 0.0
    %1367 = vmatpush1.msra.mxu0 0.0
    %1368 = vmatprep.subr.mxu0 0.0
    %1369 = vmatpush1.msra.mxu0 0.0
    %1370 = vmatprep.subr.mxu0 0.0
    %1371 = vmatpush1.msra.mxu0 0.0
    %1372 = vmatprep.mubr.f32.mxu0 0.0
    %1373 = vmatmul.mubr.f32.gmra.mrb[0].mxu0 %v1306
    %v1374 = vpop.f32.mrb[0].mxu0
    %v1375 = vadd.f32 %v1304, %v1374
    %v1376 = vpop.f32.mrb[0].mxu0
    %1377 = vdwg.mxu0
    %vm1378 = vcmask 58368
    %1379 = vst.msk [vmem:[#allocation2] sm:$0x3] %vm1378, %v1375
    // Predicated region
    $region26: #{mlp_rnn_forward.1} parent=1 // pred_check
      _
    $region27: #{mlp_rnn_forward.1} parent=1 // pred_check_branch
      %1381 = sbr.rel (0) target = $region29
    $region28: #{mlp_rnn_forward.1} parent=1 // pred_region
      %s1383 = ssub.s32 32, 32
      %1384 = vsyncadd [#allocation3], %s1383
      %s1386 = sshll.u32 [#allocation2], 4
      %s1387 = int_to_ptr.vmem [resolvable:$true] %s1386
      %1389 = dma.vmem_to_hbm [thread:$0]  %s1387, 32, %s6, [#allocation3]
    $region29: #{mlp_rnn_forward.1} parent=1 // pred_fallthru
      _
    // Predicated region
    $region30: #{mlp_rnn_forward.1} parent=1 // pred_check
      _
    $region31: #{mlp_rnn_forward.1} parent=1 // pred_check_branch
      %1391 = sbr.rel (0) target = $region33
    $region32: #{mlp_rnn_forward.1} parent=1 // pred_region
      %1392 = dma.done [#allocation3], 32
    $region33: #{mlp_rnn_forward.1} parent=1 // pred_fallthru
      _
    %1393 = vsyncpa [#allocation3], 1

</llo_original>
